<compile_context>
chip_gen: v6e
topology: v6e:2x2x1
jax: 0.10.0
libtpu: 0.0.40
codegen_flags: <defaults>
</compile_context>

<pallas_src>
import functools

import jax
import jax.numpy as jnp
from jax.experimental import pallas as pl
from jax.experimental.pallas import tpu as pltpu

BN_EPS = 1e-5


def _vmem_limit_bytes():
    try:
        cap = getattr(pltpu.get_tpu_info(), "vmem_capacity_bytes", None)
        if cap:
            return int(min(cap * 3 // 4, 100 * 1024 * 1024))
    except Exception:
        pass
    return 48 * 1024 * 1024


_VMEM_LIMIT = _vmem_limit_bytes()


def _compiler_params(dims):
    return pltpu.CompilerParams(dimension_semantics=dims,
                                vmem_limit_bytes=_VMEM_LIMIT)


def _pick_images_per_tile(batch, ohow):
    """Smallest divisor tb of `batch` whose tile (tb*ohow lanes) is lane-dense:
    >=128 lanes and (unless it covers all of M) a multiple of 128.  Smaller
    tiles -> more grid steps -> a usable parallel axis for v7x's 2 TCs."""
    for tb in range(1, batch + 1):
        if batch % tb:
            continue
        tm = tb * ohow
        if tm >= 128 and (tb == batch or tm % 128 == 0):
            return tb
    return batch


# ----------------------------- in-kernel helpers ----------------------------

def _mish(y):
    # mish(x) = x * tanh(softplus(x)), with
    # tanh(softplus(x)) = ((1+e^x)^2 - 1) / ((1+e^x)^2 + 1)
    # -> one exp + one approximate (EUP) reciprocal, all in f32 (v5e-safe).
    t = jnp.exp(jnp.minimum(y, 20.0))
    u = (1.0 + t) * (1.0 + t)
    tsp = (u - 1.0) * pl.reciprocal(u + 1.0, approx=True)
    return y * jnp.where(y > 20.0, 1.0, tsp)


# ------------------------------ Pallas kernels ------------------------------

def _front_conv_kernel(xph_ref, w_ref, b_ref, o_ref, *, oh, ow, tb, cin):
    """3x3 / stride-2 / pad-1 conv + folded BN + Mish, lane-dense output.

    xph_ref: (tb, 4, cin, oh+1, ow+1) bf16  space-to-depth phases of padded x
    w_ref  : (cout, 9*cin) bf16             (kh, kw, cin) K-packed, BN-folded
    b_ref  : (cout, 1) f32
    o_ref  : (cout, tb*oh*ow) bf16          lane-dense
    """
    ohow = oh * ow
    cols = []
    for bi in range(tb):
        taps = []
        for kh in range(3):
            for kw in range(3):
                p = (kh % 2) * 2 + (kw % 2)
                taps.append(
                    xph_ref[bi, p, :, pl.ds(kh // 2, oh), pl.ds(kw // 2, ow)])
        # (9*cin, oh, ow) -> (9*cin, ohow): K-packed lhs, one matmul per tile.
        cols.append(jnp.concatenate(taps, axis=0).reshape(9 * cin, ohow))
    lhs = cols[0] if tb == 1 else jnp.concatenate(cols, axis=1)
    acc = jnp.dot(w_ref[...], lhs, preferred_element_type=jnp.float32)
    o_ref[...] = _mish(acc + b_ref[...]).astype(o_ref.dtype)


def _csp_body_kernel(*refs, res_num, ow):
    """Entire CSP body fused: left0 -> res blocks -> left2, right, concat, back.

    refs = (x, masks, w_l0, b_l0, [w_c1, b_c1, w_c2, b_c2]*res_num,
            w_l2, b_l2, w_r, b_r, w_back, b_back, out)
    x     : (cout, tm) bf16  front-conv output tile (whole images)
    masks : (9, tm)   bf16   0/1 per-tap spatial-boundary masks
    out   : (cout, tm) f32   lane-dense
    """
    x_ref, m_ref = refs[0], refs[1]
    o_ref = refs[-1]
    wb = refs[2:-1]
    masks = m_ref[...]

    def conv1x1(v, w_ref, b_ref):
        acc = jnp.dot(w_ref[...], v, preferred_element_type=jnp.float32)
        return _mish(acc + b_ref[...])

    def conv3x3(v, w_ref, b_ref):
        # K-packed 3x3 (pad=1, stride=1): 8 lane-rolled + masked copies plus the
        # unshifted center, stacked along K, then a single matmul.
        # TODO(synk): pltpu.roll (XLU) could replace jnp.roll's slice+concat.
        pieces = []
        for kh in range(3):
            for kw in range(3):
                s = (kh - 1) * ow + (kw - 1)
                if s == 0:
                    pieces.append(v)
                else:
                    t = kh * 3 + kw
                    pieces.append(jnp.roll(v, -s, axis=1) * masks[t:t + 1, :])
        lhs = jnp.concatenate(pieces, axis=0)          # (9*C, tm) bf16
        acc = jnp.dot(w_ref[...], lhs, preferred_element_type=jnp.float32)
        return _mish(acc + b_ref[...])

    it = iter(range(0, len(wb), 2))

    def take():
        j = next(it)
        return wb[j], wb[j + 1]

    x = x_ref[...]                                     # (cout, tm) bf16
    w, b = take()
    l = conv1x1(x, w, b).astype(jnp.bfloat16)          # left0 (1x1)
    for _ in range(res_num):
        w1, b1 = take()
        w2, b2 = take()
        h = conv1x1(l, w1, b1).astype(jnp.bfloat16)    # res c1 (1x1)
        l = (conv3x3(h, w2, b2)                        # res c2 (3x3) + residual
             + l.astype(jnp.float32)).astype(jnp.bfloat16)
    w, b = take()
    l = conv1x1(l, w, b).astype(jnp.bfloat16)          # left2 (1x1)
    w, b = take()
    r = conv1x1(x, w, b).astype(jnp.bfloat16)          # right (1x1)
    w, b = take()
    cat = jnp.concatenate([l, r], axis=0)              # fused concat (no HBM)
    o_ref[...] = conv1x1(cat, w, b).astype(o_ref.dtype)  # back (1x1)


# ------------------------------- glue (JAX) ---------------------------------

def _front_conv_call(x_nchw, w, b, oh, ow, tb):
    B, cin, H, W = x_nchw.shape
    cout = w.shape[0]
    xt = jnp.transpose(x_nchw, (1, 0, 2, 3)).astype(jnp.float32)  # (cin,B,H,W)
    hp, wp = 2 * (oh + 1), 2 * (ow + 1)
    xp = jnp.pad(xt, ((0, 0), (0, 0), (1, hp - H - 1), (1, wp - W - 1)))
    # TODO(synk): phase split done by XLA (one extra ~input-sized HBM pass); an
    #             in-kernel strided pl.ds read of xp would remove it.
    xph = jnp.stack([xp[:, :, pu::2, pv::2]
                     for pu in range(2) for pv in range(2)], axis=0)
    xph = jnp.transpose(xph, (2, 0, 1, 3, 4)).astype(jnp.bfloat16)
    # (B, 4, cin, oh+1, ow+1)

    M = B * oh * ow
    kernel = functools.partial(_front_conv_kernel, oh=oh, ow=ow, tb=tb, cin=cin)
    return pl.pallas_call(
        kernel,
        out_shape=jax.ShapeDtypeStruct((cout, M), jnp.bfloat16),
        grid_spec=pltpu.PrefetchScalarGridSpec(
            num_scalar_prefetch=0,
            grid=(B // tb,),
            in_specs=[
                pl.BlockSpec((tb, 4, cin, oh + 1, ow + 1),
                             lambda i: (i, 0, 0, 0, 0)),
                pl.BlockSpec(w.shape, lambda i: (0, 0)),
                pl.BlockSpec(b.shape, lambda i: (0, 0)),
            ],
            out_specs=pl.BlockSpec((cout, tb * oh * ow), lambda i: (0, i))),
        compiler_params=_compiler_params(("parallel",)),
    )(xph, w, b)


def _make_tap_masks(tb, oh, ow, dtype=jnp.bfloat16):
    """(9, tb*oh*ow) 0/1 masks: tap t=(kh*3+kw) is valid where the (kh-1,kw-1)
    neighbour stays inside the same image (zero padding elsewhere)."""
    hh, ww = jnp.meshgrid(jnp.arange(oh), jnp.arange(ow), indexing="ij")
    rows = []
    for kh in range(3):
        for kw in range(3):
            dh, dw = kh - 1, kw - 1
            m = ((hh + dh >= 0) & (hh + dh < oh) &
                 (ww + dw >= 0) & (ww + dw < ow))
            rows.append(jnp.tile(m.reshape(1, oh * ow), (1, tb)))
    return jnp.concatenate(rows, axis=0).astype(dtype)


def _csp_body_call(front_out, masks, params, ow):
    cout, M = front_out.shape
    tm = masks.shape[1]
    grid = (M // tm,)

    wb = [*params["left0"]]
    for rp in params["res_blocks"]:
        wb += [*rp["c1"], *rp["c2"]]
    wb += [*params["left2"], *params["right"], *params["back"]]

    in_specs = ([pl.BlockSpec((cout, tm), lambda i: (0, i)),
                 pl.BlockSpec(masks.shape, lambda i: (0, 0))]
                + [pl.BlockSpec(a.shape, lambda i: (0, 0)) for a in wb])

    kernel = functools.partial(_csp_body_kernel,
                               res_num=len(params["res_blocks"]), ow=ow)
    return pl.pallas_call(
        kernel,
        out_shape=jax.ShapeDtypeStruct((cout, M), jnp.float32),
        grid_spec=pltpu.PrefetchScalarGridSpec(
            num_scalar_prefetch=0,
            grid=grid,
            in_specs=in_specs,
            out_specs=pl.BlockSpec((cout, tm), lambda i: (0, i))),
        compiler_params=_compiler_params(("parallel",)),
    )(front_out, masks, *wb)


# ------------------------------- parameters ---------------------------------

def make_conv_params(key, in_c, out_c, k):
    """Deterministic Conv2d(no bias)+BatchNorm2d, folded (eval mode); weights
    are K-packed as (out_c, k*k*in_c) bf16 with (kh, kw, cin) column order."""
    fan_in = in_c * k * k
    bound = 1.0 / (fan_in ** 0.5)
    w = jax.random.uniform(key, (out_c, in_c, k, k), jnp.float32, -bound, bound)
    gamma = jnp.ones((out_c,), jnp.float32)
    beta = jnp.zeros((out_c,), jnp.float32)
    mean = jnp.zeros((out_c,), jnp.float32)
    var = jnp.ones((out_c,), jnp.float32)
    scale = gamma / jnp.sqrt(var + BN_EPS)
    bias = (beta - mean * scale).reshape(out_c, 1)
    wp = jnp.transpose(w, (0, 2, 3, 1)).reshape(out_c, k * k * in_c)
    wp = wp * scale[:, None]
    return wp.astype(jnp.bfloat16), bias


def make_cspnet_params(key, in_c, out_c, res_num):
    """CSPNet(in_c, out_c, res_num, is_first=False) parameters."""
    half = out_c // 2
    n_keys = 5 + 2 * res_num
    keys = jax.random.split(key, n_keys)
    ki = iter(range(n_keys))
    params = {
        "front": make_conv_params(keys[next(ki)], in_c, out_c, 3),
        "left0": make_conv_params(keys[next(ki)], out_c, half, 1),
        "res_blocks": [],
    }
    for _ in range(res_num):
        params["res_blocks"].append({
            "c1": make_conv_params(keys[next(ki)], half, half, 1),
            "c2": make_conv_params(keys[next(ki)], half, half, 3),
        })
    params["left2"] = make_conv_params(keys[next(ki)], half, half, 1)
    params["right"] = make_conv_params(keys[next(ki)], out_c, half, 1)
    params["back"] = make_conv_params(keys[next(ki)], out_c, out_c, 1)
    return params


# -------------------------------- forward -----------------------------------

def cspnet_forward(x_nchw, params):
    """Matches CSPNet.forward (is_first=False).  Input/output are NCHW."""
    B, _, H, W = x_nchw.shape
    cout = params["front"][0].shape[0]
    oh = (H - 1) // 2 + 1
    ow = (W - 1) // 2 + 1
    ohow = oh * ow
    if ohow > 4096:
        # TODO(synk): halo-streamed M tiling needed for large feature maps.
        raise NotImplementedError("feature map too large for fused VMEM body")
    tb = _pick_images_per_tile(B, ohow)

    front = _front_conv_call(x_nchw, *params["front"], oh=oh, ow=ow, tb=tb)
    masks = _make_tap_masks(tb, oh, ow)
    y = _csp_body_call(front, masks, params, ow=ow)      # (cout, B*oh*ow) f32
    y = y.reshape(cout, B, oh, ow)
    return jnp.transpose(y, (1, 0, 2, 3))                # -> NCHW


# ---------------------- pure-JAX reference (for checking) -------------------

def _mish_ref(y):
    sp = jnp.where(y > 20.0, y, jnp.log1p(jnp.exp(jnp.minimum(y, 20.0))))
    return y * jnp.tanh(sp)


def _im2col(x, k, stride, pad):
    """(B,H,W,C) NHWC -> (B,oh,ow,k*k*C) with (kh,kw,cin) channel order."""
    B, H, W, C = x.shape
    xp = jnp.pad(x, ((0, 0), (pad, pad), (pad, pad), (0, 0)))
    oh = (H + 2 * pad - k) // stride + 1
    ow = (W + 2 * pad - k) // stride + 1
    cols = []
    for ki in range(k):
        for kj in range(k):
            cols.append(
                xp[:, ki:ki + stride * (oh - 1) + 1:stride,
                   kj:kj + stride * (ow - 1) + 1:stride, :])
    return jnp.concatenate(cols, axis=-1)


def _conv_ref(x, w, b, k, stride, pad):
    patches = _im2col(x, k, stride, pad)
    B, oh, ow, K = patches.shape
    y = patches.reshape(-1, K) @ w.astype(jnp.float32).T + b.reshape(1, -1)
    return _mish_ref(y).reshape(B, oh, ow, -1)


def cspnet_reference(x_nchw, params):
    x = jnp.transpose(x_nchw, (0, 2, 3, 1))
    out = _conv_ref(x, *params["front"], 3, 2, 1)
    l = _conv_ref(out, *params["left0"], 1, 1, 0)
    for rp in params["res_blocks"]:
        h = _conv_ref(l, *rp["c1"], 1, 1, 0)
        l = _conv_ref(h, *rp["c2"], 3, 1, 1) + l
    l = _conv_ref(l, *params["left2"], 1, 1, 0)
    r = _conv_ref(out, *params["right"], 1, 1, 0)
    cat = jnp.concatenate([l, r], axis=-1)
    y = _conv_ref(cat, *params["back"], 1, 1, 0)
    return jnp.transpose(y, (0, 3, 1, 2))


if __name__ == "__main__":
    key = jax.random.PRNGKey(0)
    pkey, xkey = jax.random.split(key)

    B, in_c, H, W = 2, 4, 16, 16
    out_c, res_num = 16, 1

    params = make_cspnet_params(pkey, in_c, out_c, res_num)
    x = jax.random.normal(xkey, (B, in_c, H, W), jnp.float32)

    y = jax.jit(cspnet_forward)(x, params)
    jax.block_until_ready(y)
    assert y.shape == (B, out_c, H // 2, W // 2), y.shape
    assert bool(jnp.all(jnp.isfinite(y)))

    # Numerical sanity check vs. a pure-JAX f32 reference (loose tolerance:
    # bf16 MXU inputs, bf16 intermediates, approximate reciprocal in Mish).
    y_ref = cspnet_reference(x, params)
    max_err = float(jnp.max(jnp.abs(y - y_ref)))
    assert bool(jnp.allclose(y, y_ref, rtol=0.1, atol=0.15)), max_err

    print("KERNEL_OK")
</pallas_src>

<mosaic_0001>
module attributes {stable_mosaic.version = 11 : i64} {
  func.func @_front_conv_kernel(%arg0: i32, %arg1: memref<2x4x4x9x9xbf16, #tpu.memory_space<vmem>>, %arg2: memref<16x36xbf16, #tpu.memory_space<vmem>>, %arg3: memref<16x1xf32, #tpu.memory_space<vmem>>, %arg4: memref<16x128xbf16, #tpu.memory_space<vmem>>) attributes {dimension_semantics = [#tpu.dimension_semantics<parallel>], iteration_bounds = array<i64: 1>, scalar_prefetch = 0 : i64, scratch_operands = 0 : i64, tpu.core_type = #tpu.core_type<tc>, window_params = [{transform_indices = @transform_0, window_bounds = array<i64: 2, 4, 4, 9, 9>}, {pipeline_mode = #tpu.pipeline_mode<synchronous>, transform_indices = @transform_1, window_bounds = array<i64: 16, 36>}, {pipeline_mode = #tpu.pipeline_mode<synchronous>, transform_indices = @transform_2, window_bounds = array<i64: 16, 1>}, {transform_indices = @transform_3, window_bounds = array<i64: 16, 128>}]} {
    %c0 = arith.constant 0 : index
    %c0_0 = arith.constant 0 : index
    %c0_1 = arith.constant 0 : index
    %c0_2 = arith.constant 0 : index
    %c0_3 = arith.constant 0 : index
    %0 = vector.load %arg1[%c0, %c0_0, %c0_1, %c0_2, %c0_3] : memref<2x4x4x9x9xbf16, #tpu.memory_space<vmem>>, vector<1x1x4x8x8xbf16>
    %1 = vector.shape_cast %0 : vector<1x1x4x8x8xbf16> to vector<4x8x8xbf16>
    %c0_4 = arith.constant 0 : index
    %c1 = arith.constant 1 : index
    %c0_5 = arith.constant 0 : index
    %c0_6 = arith.constant 0 : index
    %c0_7 = arith.constant 0 : index
    %2 = vector.load %arg1[%c0_4, %c1, %c0_5, %c0_6, %c0_7] : memref<2x4x4x9x9xbf16, #tpu.memory_space<vmem>>, vector<1x1x4x8x8xbf16>
    %3 = vector.shape_cast %2 : vector<1x1x4x8x8xbf16> to vector<4x8x8xbf16>
    %c0_8 = arith.constant 0 : index
    %c0_9 = arith.constant 0 : index
    %c0_10 = arith.constant 0 : index
    %c0_11 = arith.constant 0 : index
    %c1_12 = arith.constant 1 : index
    %4 = vector.load %arg1[%c0_8, %c0_9, %c0_10, %c0_11, %c1_12] : memref<2x4x4x9x9xbf16, #tpu.memory_space<vmem>>, vector<1x1x4x8x8xbf16>
    %5 = vector.shape_cast %4 : vector<1x1x4x8x8xbf16> to vector<4x8x8xbf16>
    %c0_13 = arith.constant 0 : index
    %c2 = arith.constant 2 : index
    %c0_14 = arith.constant 0 : index
    %c0_15 = arith.constant 0 : index
    %c0_16 = arith.constant 0 : index
    %6 = vector.load %arg1[%c0_13, %c2, %c0_14, %c0_15, %c0_16] : memref<2x4x4x9x9xbf16, #tpu.memory_space<vmem>>, vector<1x1x4x8x8xbf16>
    %7 = vector.shape_cast %6 : vector<1x1x4x8x8xbf16> to vector<4x8x8xbf16>
    %c0_17 = arith.constant 0 : index
    %c3 = arith.constant 3 : index
    %c0_18 = arith.constant 0 : index
    %c0_19 = arith.constant 0 : index
    %c0_20 = arith.constant 0 : index
    %8 = vector.load %arg1[%c0_17, %c3, %c0_18, %c0_19, %c0_20] : memref<2x4x4x9x9xbf16, #tpu.memory_space<vmem>>, vector<1x1x4x8x8xbf16>
    %9 = vector.shape_cast %8 : vector<1x1x4x8x8xbf16> to vector<4x8x8xbf16>
    %c0_21 = arith.constant 0 : index
    %c2_22 = arith.constant 2 : index
    %c0_23 = arith.constant 0 : index
    %c0_24 = arith.constant 0 : index
    %c1_25 = arith.constant 1 : index
    %10 = vector.load %arg1[%c0_21, %c2_22, %c0_23, %c0_24, %c1_25] : memref<2x4x4x9x9xbf16, #tpu.memory_space<vmem>>, vector<1x1x4x8x8xbf16>
    %11 = vector.shape_cast %10 : vector<1x1x4x8x8xbf16> to vector<4x8x8xbf16>
    %c0_26 = arith.constant 0 : index
    %c0_27 = arith.constant 0 : index
    %c0_28 = arith.constant 0 : index
    %c1_29 = arith.constant 1 : index
    %c0_30 = arith.constant 0 : index
    %12 = vector.load %arg1[%c0_26, %c0_27, %c0_28, %c1_29, %c0_30] : memref<2x4x4x9x9xbf16, #tpu.memory_space<vmem>>, vector<1x1x4x8x8xbf16>
    %13 = vector.shape_cast %12 : vector<1x1x4x8x8xbf16> to vector<4x8x8xbf16>
    %c0_31 = arith.constant 0 : index
    %c1_32 = arith.constant 1 : index
    %c0_33 = arith.constant 0 : index
    %c1_34 = arith.constant 1 : index
    %c0_35 = arith.constant 0 : index
    %14 = vector.load %arg1[%c0_31, %c1_32, %c0_33, %c1_34, %c0_35] : memref<2x4x4x9x9xbf16, #tpu.memory_space<vmem>>, vector<1x1x4x8x8xbf16>
    %15 = vector.shape_cast %14 : vector<1x1x4x8x8xbf16> to vector<4x8x8xbf16>
    %c0_36 = arith.constant 0 : index
    %c0_37 = arith.constant 0 : index
    %c0_38 = arith.constant 0 : index
    %c1_39 = arith.constant 1 : index
    %c1_40 = arith.constant 1 : index
    %16 = vector.load %arg1[%c0_36, %c0_37, %c0_38, %c1_39, %c1_40] : memref<2x4x4x9x9xbf16, #tpu.memory_space<vmem>>, vector<1x1x4x8x8xbf16>
    %17 = vector.shape_cast %16 : vector<1x1x4x8x8xbf16> to vector<4x8x8xbf16>
    %18 = tpu.concatenate %1, %3, %5, %7, %9, %11, %13, %15, %17 in 0 : vector<4x8x8xbf16>, vector<4x8x8xbf16>, vector<4x8x8xbf16>, vector<4x8x8xbf16>, vector<4x8x8xbf16>, vector<4x8x8xbf16>, vector<4x8x8xbf16>, vector<4x8x8xbf16>, vector<4x8x8xbf16> -> vector<36x8x8xbf16>
    %19 = vector.shape_cast %18 : vector<36x8x8xbf16> to vector<36x64xbf16>
    %c1_41 = arith.constant 1 : index
    %c0_42 = arith.constant 0 : index
    %c0_43 = arith.constant 0 : index
    %c0_44 = arith.constant 0 : index
    %c0_45 = arith.constant 0 : index
    %20 = vector.load %arg1[%c1_41, %c0_42, %c0_43, %c0_44, %c0_45] : memref<2x4x4x9x9xbf16, #tpu.memory_space<vmem>>, vector<1x1x4x8x8xbf16>
    %21 = vector.shape_cast %20 : vector<1x1x4x8x8xbf16> to vector<4x8x8xbf16>
    %c1_46 = arith.constant 1 : index
    %c1_47 = arith.constant 1 : index
    %c0_48 = arith.constant 0 : index
    %c0_49 = arith.constant 0 : index
    %c0_50 = arith.constant 0 : index
    %22 = vector.load %arg1[%c1_46, %c1_47, %c0_48, %c0_49, %c0_50] : memref<2x4x4x9x9xbf16, #tpu.memory_space<vmem>>, vector<1x1x4x8x8xbf16>
    %23 = vector.shape_cast %22 : vector<1x1x4x8x8xbf16> to vector<4x8x8xbf16>
    %c1_51 = arith.constant 1 : index
    %c0_52 = arith.constant 0 : index
    %c0_53 = arith.constant 0 : index
    %c0_54 = arith.constant 0 : index
    %c1_55 = arith.constant 1 : index
    %24 = vector.load %arg1[%c1_51, %c0_52, %c0_53, %c0_54, %c1_55] : memref<2x4x4x9x9xbf16, #tpu.memory_space<vmem>>, vector<1x1x4x8x8xbf16>
    %25 = vector.shape_cast %24 : vector<1x1x4x8x8xbf16> to vector<4x8x8xbf16>
    %c1_56 = arith.constant 1 : index
    %c2_57 = arith.constant 2 : index
    %c0_58 = arith.constant 0 : index
    %c0_59 = arith.constant 0 : index
    %c0_60 = arith.constant 0 : index
    %26 = vector.load %arg1[%c1_56, %c2_57, %c0_58, %c0_59, %c0_60] : memref<2x4x4x9x9xbf16, #tpu.memory_space<vmem>>, vector<1x1x4x8x8xbf16>
    %27 = vector.shape_cast %26 : vector<1x1x4x8x8xbf16> to vector<4x8x8xbf16>
    %c1_61 = arith.constant 1 : index
    %c3_62 = arith.constant 3 : index
    %c0_63 = arith.constant 0 : index
    %c0_64 = arith.constant 0 : index
    %c0_65 = arith.constant 0 : index
    %28 = vector.load %arg1[%c1_61, %c3_62, %c0_63, %c0_64, %c0_65] : memref<2x4x4x9x9xbf16, #tpu.memory_space<vmem>>, vector<1x1x4x8x8xbf16>
    %29 = vector.shape_cast %28 : vector<1x1x4x8x8xbf16> to vector<4x8x8xbf16>
    %c1_66 = arith.constant 1 : index
    %c2_67 = arith.constant 2 : index
    %c0_68 = arith.constant 0 : index
    %c0_69 = arith.constant 0 : index
    %c1_70 = arith.constant 1 : index
    %30 = vector.load %arg1[%c1_66, %c2_67, %c0_68, %c0_69, %c1_70] : memref<2x4x4x9x9xbf16, #tpu.memory_space<vmem>>, vector<1x1x4x8x8xbf16>
    %31 = vector.shape_cast %30 : vector<1x1x4x8x8xbf16> to vector<4x8x8xbf16>
    %c1_71 = arith.constant 1 : index
    %c0_72 = arith.constant 0 : index
    %c0_73 = arith.constant 0 : index
    %c1_74 = arith.constant 1 : index
    %c0_75 = arith.constant 0 : index
    %32 = vector.load %arg1[%c1_71, %c0_72, %c0_73, %c1_74, %c0_75] : memref<2x4x4x9x9xbf16, #tpu.memory_space<vmem>>, vector<1x1x4x8x8xbf16>
    %33 = vector.shape_cast %32 : vector<1x1x4x8x8xbf16> to vector<4x8x8xbf16>
    %c1_76 = arith.constant 1 : index
    %c1_77 = arith.constant 1 : index
    %c0_78 = arith.constant 0 : index
    %c1_79 = arith.constant 1 : index
    %c0_80 = arith.constant 0 : index
    %34 = vector.load %arg1[%c1_76, %c1_77, %c0_78, %c1_79, %c0_80] : memref<2x4x4x9x9xbf16, #tpu.memory_space<vmem>>, vector<1x1x4x8x8xbf16>
    %35 = vector.shape_cast %34 : vector<1x1x4x8x8xbf16> to vector<4x8x8xbf16>
    %c1_81 = arith.constant 1 : index
    %c0_82 = arith.constant 0 : index
    %c0_83 = arith.constant 0 : index
    %c1_84 = arith.constant 1 : index
    %c1_85 = arith.constant 1 : index
    %36 = vector.load %arg1[%c1_81, %c0_82, %c0_83, %c1_84, %c1_85] : memref<2x4x4x9x9xbf16, #tpu.memory_space<vmem>>, vector<1x1x4x8x8xbf16>
    %37 = vector.shape_cast %36 : vector<1x1x4x8x8xbf16> to vector<4x8x8xbf16>
    %38 = tpu.concatenate %21, %23, %25, %27, %29, %31, %33, %35, %37 in 0 : vector<4x8x8xbf16>, vector<4x8x8xbf16>, vector<4x8x8xbf16>, vector<4x8x8xbf16>, vector<4x8x8xbf16>, vector<4x8x8xbf16>, vector<4x8x8xbf16>, vector<4x8x8xbf16>, vector<4x8x8xbf16> -> vector<36x8x8xbf16>
    %39 = vector.shape_cast %38 : vector<36x8x8xbf16> to vector<36x64xbf16>
    %40 = tpu.concatenate %19, %39 in 1 : vector<36x64xbf16>, vector<36x64xbf16> -> vector<36x128xbf16>
    %c0_86 = arith.constant 0 : index
    %c0_87 = arith.constant 0 : index
    %41 = vector.load %arg2[%c0_86, %c0_87] : memref<16x36xbf16, #tpu.memory_space<vmem>>, vector<16x36xbf16>
    %cst = arith.constant dense<0.000000e+00> : vector<16x128xf32>
    %42 = tpu.matmul %41, %40, %cst {dimension_numbers = #tpu.dot_dimension_numbers<[1], [0], [0], [1], [0, 0, 1, 1], [], []>} : vector<16x36xbf16>, vector<36x128xbf16>, vector<16x128xf32> -> vector<16x128xf32>
    %c0_88 = arith.constant 0 : index
    %c0_89 = arith.constant 0 : index
    %43 = vector.load %arg3[%c0_88, %c0_89] : memref<16x1xf32, #tpu.memory_space<vmem>>, vector<16x1xf32>
    %44 = vector.broadcast %43 : vector<16x1xf32> to vector<16x128xf32>
    %45 = arith.addf %42, %44 : vector<16x128xf32>
    %cst_90 = arith.constant 2.000000e+01 : f32
    %46 = vector.broadcast %cst_90 : f32 to vector<16x128xf32>
    %47 = arith.minimumf %45, %46 : vector<16x128xf32>
    %48 = math.exp %47 : vector<16x128xf32>
    %cst_91 = arith.constant 1.000000e+00 : f32
    %49 = vector.broadcast %cst_91 : f32 to vector<16x128xf32>
    %50 = arith.addf %49, %48 : vector<16x128xf32>
    %cst_92 = arith.constant 1.000000e+00 : f32
    %51 = vector.broadcast %cst_92 : f32 to vector<16x128xf32>
    %52 = arith.addf %51, %48 : vector<16x128xf32>
    %53 = arith.mulf %50, %52 : vector<16x128xf32>
    %cst_93 = arith.constant 1.000000e+00 : f32
    %54 = vector.broadcast %cst_93 : f32 to vector<16x128xf32>
    %55 = arith.subf %53, %54 : vector<16x128xf32>
    %cst_94 = arith.constant 1.000000e+00 : f32
    %56 = vector.broadcast %cst_94 : f32 to vector<16x128xf32>
    %57 = arith.addf %53, %56 : vector<16x128xf32>
    %58 = tpu.reciprocal %57 {approx = true} : vector<16x128xf32> -> vector<16x128xf32>
    %59 = arith.mulf %55, %58 : vector<16x128xf32>
    %cst_95 = arith.constant 2.000000e+01 : f32
    %60 = vector.broadcast %cst_95 : f32 to vector<16x128xf32>
    %61 = arith.cmpf ogt, %45, %60 : vector<16x128xf32>
    %cst_96 = arith.constant 1.000000e+00 : f32
    %62 = vector.broadcast %cst_96 : f32 to vector<16x128xf32>
    %63 = arith.select %61, %62, %59 : vector<16x128xi1>, vector<16x128xf32>
    %64 = arith.mulf %45, %63 : vector<16x128xf32>
    %65 = arith.truncf %64 : vector<16x128xf32> to vector<16x128xbf16>
    %c0_97 = arith.constant 0 : index
    %c0_98 = arith.constant 0 : index
    %66 = vector.load %arg4[%c0_97, %c0_98] : memref<16x128xbf16, #tpu.memory_space<vmem>>, vector<16x128xbf16>
    tpu.vector_store %arg4[%c0_97, %c0_98], %65 {strides = array<i32>} : memref<16x128xbf16, #tpu.memory_space<vmem>>, vector<16x128xbf16>,
    return
  }
  func.func @transform_0(%arg0: i32) -> (i32, i32, i32, i32, i32) {
    %c0_i32 = arith.constant 0 : i32
    %c0_i32_0 = arith.constant 0 : i32
    %c0_i32_1 = arith.constant 0 : i32
    %c0_i32_2 = arith.constant 0 : i32
    %c0_i32_3 = arith.constant 0 : i32
    return %arg0, %c0_i32, %c0_i32_0, %c0_i32_1, %c0_i32_2 : i32, i32, i32, i32, i32
  }
  func.func @transform_1(%arg0: i32) -> (i32, i32) {
    %c0_i32 = arith.constant 0 : i32
    %c0_i32_0 = arith.constant 0 : i32
    %c0_i32_1 = arith.constant 0 : i32
    return %c0_i32, %c0_i32_0 : i32, i32
  }
  func.func @transform_2(%arg0: i32) -> (i32, i32) {
    %c0_i32 = arith.constant 0 : i32
    %c0_i32_0 = arith.constant 0 : i32
    %c0_i32_1 = arith.constant 0 : i32
    return %c0_i32, %c0_i32_0 : i32, i32
  }
  func.func @transform_3(%arg0: i32) -> (i32, i32) {
    %c0_i32 = arith.constant 0 : i32
    %c0_i32_0 = arith.constant 0 : i32
    return %c0_i32, %arg0 : i32, i32
  }
}

module attributes {stable_mosaic.version = 11 : i64} {
  func.func @_csp_body_kernel(%arg0: i32, %arg1: memref<16x128xbf16, #tpu.memory_space<vmem>>, %arg2: memref<9x128xbf16, #tpu.memory_space<vmem>>, %arg3: memref<8x16xbf16, #tpu.memory_space<vmem>>, %arg4: memref<8x1xf32, #tpu.memory_space<vmem>>, %arg5: memref<8x8xbf16, #tpu.memory_space<vmem>>, %arg6: memref<8x1xf32, #tpu.memory_space<vmem>>, %arg7: memref<8x72xbf16, #tpu.memory_space<vmem>>, %arg8: memref<8x1xf32, #tpu.memory_space<vmem>>, %arg9: memref<8x8xbf16, #tpu.memory_space<vmem>>, %arg10: memref<8x1xf32, #tpu.memory_space<vmem>>, %arg11: memref<8x16xbf16, #tpu.memory_space<vmem>>, %arg12: memref<8x1xf32, #tpu.memory_space<vmem>>, %arg13: memref<16x16xbf16, #tpu.memory_space<vmem>>, %arg14: memref<16x1xf32, #tpu.memory_space<vmem>>, %arg15: memref<16x128xf32, #tpu.memory_space<vmem>>) attributes {dimension_semantics = [#tpu.dimension_semantics<parallel>], iteration_bounds = array<i64: 1>, scalar_prefetch = 0 : i64, scratch_operands = 0 : i64, tpu.core_type = #tpu.core_type<tc>, window_params = [{transform_indices = @transform_0, window_bounds = array<i64: 16, 128>}, {pipeline_mode = #tpu.pipeline_mode<synchronous>, transform_indices = @transform_1, window_bounds = array<i64: 9, 128>}, {pipeline_mode = #tpu.pipeline_mode<synchronous>, transform_indices = @transform_2, window_bounds = array<i64: 8, 16>}, {pipeline_mode = #tpu.pipeline_mode<synchronous>, transform_indices = @transform_3, window_bounds = array<i64: 8, 1>}, {pipeline_mode = #tpu.pipeline_mode<synchronous>, transform_indices = @transform_4, window_bounds = array<i64: 8, 8>}, {pipeline_mode = #tpu.pipeline_mode<synchronous>, transform_indices = @transform_5, window_bounds = array<i64: 8, 1>}, {pipeline_mode = #tpu.pipeline_mode<synchronous>, transform_indices = @transform_6, window_bounds = array<i64: 8, 72>}, {pipeline_mode = #tpu.pipeline_mode<synchronous>, transform_indices = @transform_7, window_bounds = array<i64: 8, 1>}, {pipeline_mode = #tpu.pipeline_mode<synchronous>, transform_indices = @transform_8, window_bounds = array<i64: 8, 8>}, {pipeline_mode = #tpu.pipeline_mode<synchronous>, transform_indices = @transform_9, window_bounds = array<i64: 8, 1>}, {pipeline_mode = #tpu.pipeline_mode<synchronous>, transform_indices = @transform_10, window_bounds = array<i64: 8, 16>}, {pipeline_mode = #tpu.pipeline_mode<synchronous>, transform_indices = @transform_11, window_bounds = array<i64: 8, 1>}, {pipeline_mode = #tpu.pipeline_mode<synchronous>, transform_indices = @transform_12, window_bounds = array<i64: 16, 16>}, {pipeline_mode = #tpu.pipeline_mode<synchronous>, transform_indices = @transform_13, window_bounds = array<i64: 16, 1>}, {transform_indices = @transform_14, window_bounds = array<i64: 16, 128>}]} {
    %c0 = arith.constant 0 : index
    %c0_0 = arith.constant 0 : index
    %0 = vector.load %arg2[%c0, %c0_0] : memref<9x128xbf16, #tpu.memory_space<vmem>>, vector<9x128xbf16>
    %c0_1 = arith.constant 0 : index
    %c0_2 = arith.constant 0 : index
    %1 = vector.load %arg1[%c0_1, %c0_2] : memref<16x128xbf16, #tpu.memory_space<vmem>>, vector<16x128xbf16>
    %c0_3 = arith.constant 0 : index
    %c0_4 = arith.constant 0 : index
    %2 = vector.load %arg3[%c0_3, %c0_4] : memref<8x16xbf16, #tpu.memory_space<vmem>>, vector<8x16xbf16>
    %cst = arith.constant dense<0.000000e+00> : vector<8x128xf32>
    %3 = tpu.matmul %2, %1, %cst {dimension_numbers = #tpu.dot_dimension_numbers<[1], [0], [0], [1], [0, 0, 1, 1], [], []>} : vector<8x16xbf16>, vector<16x128xbf16>, vector<8x128xf32> -> vector<8x128xf32>
    %c0_5 = arith.constant 0 : index
    %c0_6 = arith.constant 0 : index
    %4 = vector.load %arg4[%c0_5, %c0_6] : memref<8x1xf32, #tpu.memory_space<vmem>>, vector<8x1xf32>
    %5 = vector.broadcast %4 : vector<8x1xf32> to vector<8x128xf32>
    %6 = arith.addf %3, %5 : vector<8x128xf32>
    %cst_7 = arith.constant 2.000000e+01 : f32
    %7 = vector.broadcast %cst_7 : f32 to vector<8x128xf32>
    %8 = arith.minimumf %6, %7 : vector<8x128xf32>
    %9 = math.exp %8 : vector<8x128xf32>
    %cst_8 = arith.constant 1.000000e+00 : f32
    %10 = vector.broadcast %cst_8 : f32 to vector<8x128xf32>
    %11 = arith.addf %10, %9 : vector<8x128xf32>
    %cst_9 = arith.constant 1.000000e+00 : f32
    %12 = vector.broadcast %cst_9 : f32 to vector<8x128xf32>
    %13 = arith.addf %12, %9 : vector<8x128xf32>
    %14 = arith.mulf %11, %13 : vector<8x128xf32>
    %cst_10 = arith.constant 1.000000e+00 : f32
    %15 = vector.broadcast %cst_10 : f32 to vector<8x128xf32>
    %16 = arith.subf %14, %15 : vector<8x128xf32>
    %cst_11 = arith.constant 1.000000e+00 : f32
    %17 = vector.broadcast %cst_11 : f32 to vector<8x128xf32>
    %18 = arith.addf %14, %17 : vector<8x128xf32>
    %19 = tpu.reciprocal %18 {approx = true} : vector<8x128xf32> -> vector<8x128xf32>
    %20 = arith.mulf %16, %19 : vector<8x128xf32>
    %cst_12 = arith.constant 2.000000e+01 : f32
    %21 = vector.broadcast %cst_12 : f32 to vector<8x128xf32>
    %22 = arith.cmpf ogt, %6, %21 : vector<8x128xf32>
    %cst_13 = arith.constant 1.000000e+00 : f32
    %23 = vector.broadcast %cst_13 : f32 to vector<8x128xf32>
    %24 = arith.select %22, %23, %20 : vector<8x128xi1>, vector<8x128xf32>
    %25 = arith.mulf %6, %24 : vector<8x128xf32>
    %26 = arith.truncf %25 : vector<8x128xf32> to vector<8x128xbf16>
    %c0_14 = arith.constant 0 : index
    %c0_15 = arith.constant 0 : index
    %27 = vector.load %arg5[%c0_14, %c0_15] : memref<8x8xbf16, #tpu.memory_space<vmem>>, vector<8x8xbf16>
    %cst_16 = arith.constant dense<0.000000e+00> : vector<8x128xf32>
    %28 = tpu.matmul %27, %26, %cst_16 {dimension_numbers = #tpu.dot_dimension_numbers<[1], [0], [0], [1], [0, 0, 1, 1], [], []>} : vector<8x8xbf16>, vector<8x128xbf16>, vector<8x128xf32> -> vector<8x128xf32>
    %c0_17 = arith.constant 0 : index
    %c0_18 = arith.constant 0 : index
    %29 = vector.load %arg6[%c0_17, %c0_18] : memref<8x1xf32, #tpu.memory_space<vmem>>, vector<8x1xf32>
    %30 = vector.broadcast %29 : vector<8x1xf32> to vector<8x128xf32>
    %31 = arith.addf %28, %30 : vector<8x128xf32>
    %cst_19 = arith.constant 2.000000e+01 : f32
    %32 = vector.broadcast %cst_19 : f32 to vector<8x128xf32>
    %33 = arith.minimumf %31, %32 : vector<8x128xf32>
    %34 = math.exp %33 : vector<8x128xf32>
    %cst_20 = arith.constant 1.000000e+00 : f32
    %35 = vector.broadcast %cst_20 : f32 to vector<8x128xf32>
    %36 = arith.addf %35, %34 : vector<8x128xf32>
    %cst_21 = arith.constant 1.000000e+00 : f32
    %37 = vector.broadcast %cst_21 : f32 to vector<8x128xf32>
    %38 = arith.addf %37, %34 : vector<8x128xf32>
    %39 = arith.mulf %36, %38 : vector<8x128xf32>
    %cst_22 = arith.constant 1.000000e+00 : f32
    %40 = vector.broadcast %cst_22 : f32 to vector<8x128xf32>
    %41 = arith.subf %39, %40 : vector<8x128xf32>
    %cst_23 = arith.constant 1.000000e+00 : f32
    %42 = vector.broadcast %cst_23 : f32 to vector<8x128xf32>
    %43 = arith.addf %39, %42 : vector<8x128xf32>
    %44 = tpu.reciprocal %43 {approx = true} : vector<8x128xf32> -> vector<8x128xf32>
    %45 = arith.mulf %41, %44 : vector<8x128xf32>
    %cst_24 = arith.constant 2.000000e+01 : f32
    %46 = vector.broadcast %cst_24 : f32 to vector<8x128xf32>
    %47 = arith.cmpf ogt, %31, %46 : vector<8x128xf32>
    %cst_25 = arith.constant 1.000000e+00 : f32
    %48 = vector.broadcast %cst_25 : f32 to vector<8x128xf32>
    %49 = arith.select %47, %48, %45 : vector<8x128xi1>, vector<8x128xf32>
    %50 = arith.mulf %31, %49 : vector<8x128xf32>
    %51 = arith.truncf %50 : vector<8x128xf32> to vector<8x128xbf16>
    %52 = vector.extract_strided_slice %51 {offsets = [0, 119], sizes = [8, 9], strides = [1, 1]} : vector<8x128xbf16> to vector<8x9xbf16>
    %53 = vector.extract_strided_slice %51 {offsets = [0, 0], sizes = [8, 119], strides = [1, 1]} : vector<8x128xbf16> to vector<8x119xbf16>
    %54 = tpu.concatenate %52, %53 in 1 : vector<8x9xbf16>, vector<8x119xbf16> -> vector<8x128xbf16>
    %55 = vector.extract_strided_slice %0 {offsets = [0, 0], sizes = [1, 128], strides = [1, 1]} : vector<9x128xbf16> to vector<1x128xbf16>
    %56 = vector.broadcast %55 : vector<1x128xbf16> to vector<8x128xbf16>
    %57 = arith.mulf %54, %56 : vector<8x128xbf16>
    %58 = vector.extract_strided_slice %51 {offsets = [0, 120], sizes = [8, 8], strides = [1, 1]} : vector<8x128xbf16> to vector<8x8xbf16>
    %59 = vector.extract_strided_slice %51 {offsets = [0, 0], sizes = [8, 120], strides = [1, 1]} : vector<8x128xbf16> to vector<8x120xbf16>
    %60 = tpu.concatenate %58, %59 in 1 : vector<8x8xbf16>, vector<8x120xbf16> -> vector<8x128xbf16>
    %61 = vector.extract_strided_slice %0 {offsets = [1, 0], sizes = [1, 128], strides = [1, 1]} : vector<9x128xbf16> to vector<1x128xbf16>
    %62 = vector.broadcast %61 : vector<1x128xbf16> to vector<8x128xbf16>
    %63 = arith.mulf %60, %62 : vector<8x128xbf16>
    %64 = vector.extract_strided_slice %51 {offsets = [0, 121], sizes = [8, 7], strides = [1, 1]} : vector<8x128xbf16> to vector<8x7xbf16>
    %65 = vector.extract_strided_slice %51 {offsets = [0, 0], sizes = [8, 121], strides = [1, 1]} : vector<8x128xbf16> to vector<8x121xbf16>
    %66 = tpu.concatenate %64, %65 in 1 : vector<8x7xbf16>, vector<8x121xbf16> -> vector<8x128xbf16>
    %67 = vector.extract_strided_slice %0 {offsets = [2, 0], sizes = [1, 128], strides = [1, 1]} : vector<9x128xbf16> to vector<1x128xbf16>
    %68 = vector.broadcast %67 : vector<1x128xbf16> to vector<8x128xbf16>
    %69 = arith.mulf %66, %68 : vector<8x128xbf16>
    %70 = vector.extract_strided_slice %51 {offsets = [0, 127], sizes = [8, 1], strides = [1, 1]} : vector<8x128xbf16> to vector<8x1xbf16>
    %71 = vector.extract_strided_slice %51 {offsets = [0, 0], sizes = [8, 127], strides = [1, 1]} : vector<8x128xbf16> to vector<8x127xbf16>
    %72 = tpu.concatenate %70, %71 in 1 : vector<8x1xbf16>, vector<8x127xbf16> -> vector<8x128xbf16>
    %73 = vector.extract_strided_slice %0 {offsets = [3, 0], sizes = [1, 128], strides = [1, 1]} : vector<9x128xbf16> to vector<1x128xbf16>
    %74 = vector.broadcast %73 : vector<1x128xbf16> to vector<8x128xbf16>
    %75 = arith.mulf %72, %74 : vector<8x128xbf16>
    %76 = vector.extract_strided_slice %51 {offsets = [0, 1], sizes = [8, 127], strides = [1, 1]} : vector<8x128xbf16> to vector<8x127xbf16>
    %77 = vector.extract_strided_slice %51 {offsets = [0, 0], sizes = [8, 1], strides = [1, 1]} : vector<8x128xbf16> to vector<8x1xbf16>
    %78 = tpu.concatenate %76, %77 in 1 : vector<8x127xbf16>, vector<8x1xbf16> -> vector<8x128xbf16>
    %79 = vector.extract_strided_slice %0 {offsets = [5, 0], sizes = [1, 128], strides = [1, 1]} : vector<9x128xbf16> to vector<1x128xbf16>
    %80 = vector.broadcast %79 : vector<1x128xbf16> to vector<8x128xbf16>
    %81 = arith.mulf %78, %80 : vector<8x128xbf16>
    %82 = vector.extract_strided_slice %51 {offsets = [0, 7], sizes = [8, 121], strides = [1, 1]} : vector<8x128xbf16> to vector<8x121xbf16>
    %83 = vector.extract_strided_slice %51 {offsets = [0, 0], sizes = [8, 7], strides = [1, 1]} : vector<8x128xbf16> to vector<8x7xbf16>
    %84 = tpu.concatenate %82, %83 in 1 : vector<8x121xbf16>, vector<8x7xbf16> -> vector<8x128xbf16>
    %85 = vector.extract_strided_slice %0 {offsets = [6, 0], sizes = [1, 128], strides = [1, 1]} : vector<9x128xbf16> to vector<1x128xbf16>
    %86 = vector.broadcast %85 : vector<1x128xbf16> to vector<8x128xbf16>
    %87 = arith.mulf %84, %86 : vector<8x128xbf16>
    %88 = vector.extract_strided_slice %51 {offsets = [0, 8], sizes = [8, 120], strides = [1, 1]} : vector<8x128xbf16> to vector<8x120xbf16>
    %89 = vector.extract_strided_slice %51 {offsets = [0, 0], sizes = [8, 8], strides = [1, 1]} : vector<8x128xbf16> to vector<8x8xbf16>
    %90 = tpu.concatenate %88, %89 in 1 : vector<8x120xbf16>, vector<8x8xbf16> -> vector<8x128xbf16>
    %91 = vector.extract_strided_slice %0 {offsets = [7, 0], sizes = [1, 128], strides = [1, 1]} : vector<9x128xbf16> to vector<1x128xbf16>
    %92 = vector.broadcast %91 : vector<1x128xbf16> to vector<8x128xbf16>
    %93 = arith.mulf %90, %92 : vector<8x128xbf16>
    %94 = vector.extract_strided_slice %51 {offsets = [0, 9], sizes = [8, 119], strides = [1, 1]} : vector<8x128xbf16> to vector<8x119xbf16>
    %95 = vector.extract_strided_slice %51 {offsets = [0, 0], sizes = [8, 9], strides = [1, 1]} : vector<8x128xbf16> to vector<8x9xbf16>
    %96 = tpu.concatenate %94, %95 in 1 : vector<8x119xbf16>, vector<8x9xbf16> -> vector<8x128xbf16>
    %97 = vector.extract_strided_slice %0 {offsets = [8, 0], sizes = [1, 128], strides = [1, 1]} : vector<9x128xbf16> to vector<1x128xbf16>
    %98 = vector.broadcast %97 : vector<1x128xbf16> to vector<8x128xbf16>
    %99 = arith.mulf %96, %98 : vector<8x128xbf16>
    %100 = tpu.concatenate %57, %63, %69, %75, %51, %81, %87, %93, %99 in 0 : vector<8x128xbf16>, vector<8x128xbf16>, vector<8x128xbf16>, vector<8x128xbf16>, vector<8x128xbf16>, vector<8x128xbf16>, vector<8x128xbf16>, vector<8x128xbf16>, vector<8x128xbf16> -> vector<72x128xbf16>
    %c0_26 = arith.constant 0 : index
    %c0_27 = arith.constant 0 : index
    %101 = vector.load %arg7[%c0_26, %c0_27] : memref<8x72xbf16, #tpu.memory_space<vmem>>, vector<8x72xbf16>
    %cst_28 = arith.constant dense<0.000000e+00> : vector<8x128xf32>
    %102 = tpu.matmul %101, %100, %cst_28 {dimension_numbers = #tpu.dot_dimension_numbers<[1], [0], [0], [1], [0, 0, 1, 1], [], []>} : vector<8x72xbf16>, vector<72x128xbf16>, vector<8x128xf32> -> vector<8x128xf32>
    %c0_29 = arith.constant 0 : index
    %c0_30 = arith.constant 0 : index
    %103 = vector.load %arg8[%c0_29, %c0_30] : memref<8x1xf32, #tpu.memory_space<vmem>>, vector<8x1xf32>
    %104 = vector.broadcast %103 : vector<8x1xf32> to vector<8x128xf32>
    %105 = arith.addf %102, %104 : vector<8x128xf32>
    %cst_31 = arith.constant 2.000000e+01 : f32
    %106 = vector.broadcast %cst_31 : f32 to vector<8x128xf32>
    %107 = arith.minimumf %105, %106 : vector<8x128xf32>
    %108 = math.exp %107 : vector<8x128xf32>
    %cst_32 = arith.constant 1.000000e+00 : f32
    %109 = vector.broadcast %cst_32 : f32 to vector<8x128xf32>
    %110 = arith.addf %109, %108 : vector<8x128xf32>
    %cst_33 = arith.constant 1.000000e+00 : f32
    %111 = vector.broadcast %cst_33 : f32 to vector<8x128xf32>
    %112 = arith.addf %111, %108 : vector<8x128xf32>
    %113 = arith.mulf %110, %112 : vector<8x128xf32>
    %cst_34 = arith.constant 1.000000e+00 : f32
    %114 = vector.broadcast %cst_34 : f32 to vector<8x128xf32>
    %115 = arith.subf %113, %114 : vector<8x128xf32>
    %cst_35 = arith.constant 1.000000e+00 : f32
    %116 = vector.broadcast %cst_35 : f32 to vector<8x128xf32>
    %117 = arith.addf %113, %116 : vector<8x128xf32>
    %118 = tpu.reciprocal %117 {approx = true} : vector<8x128xf32> -> vector<8x128xf32>
    %119 = arith.mulf %115, %118 : vector<8x128xf32>
    %cst_36 = arith.constant 2.000000e+01 : f32
    %120 = vector.broadcast %cst_36 : f32 to vector<8x128xf32>
    %121 = arith.cmpf ogt, %105, %120 : vector<8x128xf32>
    %cst_37 = arith.constant 1.000000e+00 : f32
    %122 = vector.broadcast %cst_37 : f32 to vector<8x128xf32>
    %123 = arith.select %121, %122, %119 : vector<8x128xi1>, vector<8x128xf32>
    %124 = arith.mulf %105, %123 : vector<8x128xf32>
    %125 = arith.extf %26 : vector<8x128xbf16> to vector<8x128xf32>
    %126 = arith.addf %124, %125 : vector<8x128xf32>
    %127 = arith.truncf %126 : vector<8x128xf32> to vector<8x128xbf16>
    %c0_38 = arith.constant 0 : index
    %c0_39 = arith.constant 0 : index
    %128 = vector.load %arg9[%c0_38, %c0_39] : memref<8x8xbf16, #tpu.memory_space<vmem>>, vector<8x8xbf16>
    %cst_40 = arith.constant dense<0.000000e+00> : vector<8x128xf32>
    %129 = tpu.matmul %128, %127, %cst_40 {dimension_numbers = #tpu.dot_dimension_numbers<[1], [0], [0], [1], [0, 0, 1, 1], [], []>} : vector<8x8xbf16>, vector<8x128xbf16>, vector<8x128xf32> -> vector<8x128xf32>
    %c0_41 = arith.constant 0 : index
    %c0_42 = arith.constant 0 : index
    %130 = vector.load %arg10[%c0_41, %c0_42] : memref<8x1xf32, #tpu.memory_space<vmem>>, vector<8x1xf32>
    %131 = vector.broadcast %130 : vector<8x1xf32> to vector<8x128xf32>
    %132 = arith.addf %129, %131 : vector<8x128xf32>
    %cst_43 = arith.constant 2.000000e+01 : f32
    %133 = vector.broadcast %cst_43 : f32 to vector<8x128xf32>
    %134 = arith.minimumf %132, %133 : vector<8x128xf32>
    %135 = math.exp %134 : vector<8x128xf32>
    %cst_44 = arith.constant 1.000000e+00 : f32
    %136 = vector.broadcast %cst_44 : f32 to vector<8x128xf32>
    %137 = arith.addf %136, %135 : vector<8x128xf32>
    %cst_45 = arith.constant 1.000000e+00 : f32
    %138 = vector.broadcast %cst_45 : f32 to vector<8x128xf32>
    %139 = arith.addf %138, %135 : vector<8x128xf32>
    %140 = arith.mulf %137, %139 : vector<8x128xf32>
    %cst_46 = arith.constant 1.000000e+00 : f32
    %141 = vector.broadcast %cst_46 : f32 to vector<8x128xf32>
    %142 = arith.subf %140, %141 : vector<8x128xf32>
    %cst_47 = arith.constant 1.000000e+00 : f32
    %143 = vector.broadcast %cst_47 : f32 to vector<8x128xf32>
    %144 = arith.addf %140, %143 : vector<8x128xf32>
    %145 = tpu.reciprocal %144 {approx = true} : vector<8x128xf32> -> vector<8x128xf32>
    %146 = arith.mulf %142, %145 : vector<8x128xf32>
    %cst_48 = arith.constant 2.000000e+01 : f32
    %147 = vector.broadcast %cst_48 : f32 to vector<8x128xf32>
    %148 = arith.cmpf ogt, %132, %147 : vector<8x128xf32>
    %cst_49 = arith.constant 1.000000e+00 : f32
    %149 = vector.broadcast %cst_49 : f32 to vector<8x128xf32>
    %150 = arith.select %148, %149, %146 : vector<8x128xi1>, vector<8x128xf32>
    %151 = arith.mulf %132, %150 : vector<8x128xf32>
    %152 = arith.truncf %151 : vector<8x128xf32> to vector<8x128xbf16>
    %c0_50 = arith.constant 0 : index
    %c0_51 = arith.constant 0 : index
    %153 = vector.load %arg11[%c0_50, %c0_51] : memref<8x16xbf16, #tpu.memory_space<vmem>>, vector<8x16xbf16>
    %cst_52 = arith.constant dense<0.000000e+00> : vector<8x128xf32>
    %154 = tpu.matmul %153, %1, %cst_52 {dimension_numbers = #tpu.dot_dimension_numbers<[1], [0], [0], [1], [0, 0, 1, 1], [], []>} : vector<8x16xbf16>, vector<16x128xbf16>, vector<8x128xf32> -> vector<8x128xf32>
    %c0_53 = arith.constant 0 : index
    %c0_54 = arith.constant 0 : index
    %155 = vector.load %arg12[%c0_53, %c0_54] : memref<8x1xf32, #tpu.memory_space<vmem>>, vector<8x1xf32>
    %156 = vector.broadcast %155 : vector<8x1xf32> to vector<8x128xf32>
    %157 = arith.addf %154, %156 : vector<8x128xf32>
    %cst_55 = arith.constant 2.000000e+01 : f32
    %158 = vector.broadcast %cst_55 : f32 to vector<8x128xf32>
    %159 = arith.minimumf %157, %158 : vector<8x128xf32>
    %160 = math.exp %159 : vector<8x128xf32>
    %cst_56 = arith.constant 1.000000e+00 : f32
    %161 = vector.broadcast %cst_56 : f32 to vector<8x128xf32>
    %162 = arith.addf %161, %160 : vector<8x128xf32>
    %cst_57 = arith.constant 1.000000e+00 : f32
    %163 = vector.broadcast %cst_57 : f32 to vector<8x128xf32>
    %164 = arith.addf %163, %160 : vector<8x128xf32>
    %165 = arith.mulf %162, %164 : vector<8x128xf32>
    %cst_58 = arith.constant 1.000000e+00 : f32
    %166 = vector.broadcast %cst_58 : f32 to vector<8x128xf32>
    %167 = arith.subf %165, %166 : vector<8x128xf32>
    %cst_59 = arith.constant 1.000000e+00 : f32
    %168 = vector.broadcast %cst_59 : f32 to vector<8x128xf32>
    %169 = arith.addf %165, %168 : vector<8x128xf32>
    %170 = tpu.reciprocal %169 {approx = true} : vector<8x128xf32> -> vector<8x128xf32>
    %171 = arith.mulf %167, %170 : vector<8x128xf32>
    %cst_60 = arith.constant 2.000000e+01 : f32
    %172 = vector.broadcast %cst_60 : f32 to vector<8x128xf32>
    %173 = arith.cmpf ogt, %157, %172 : vector<8x128xf32>
    %cst_61 = arith.constant 1.000000e+00 : f32
    %174 = vector.broadcast %cst_61 : f32 to vector<8x128xf32>
    %175 = arith.select %173, %174, %171 : vector<8x128xi1>, vector<8x128xf32>
    %176 = arith.mulf %157, %175 : vector<8x128xf32>
    %177 = arith.truncf %176 : vector<8x128xf32> to vector<8x128xbf16>
    %178 = tpu.concatenate %152, %177 in 0 : vector<8x128xbf16>, vector<8x128xbf16> -> vector<16x128xbf16>
    %c0_62 = arith.constant 0 : index
    %c0_63 = arith.constant 0 : index
    %179 = vector.load %arg13[%c0_62, %c0_63] : memref<16x16xbf16, #tpu.memory_space<vmem>>, vector<16x16xbf16>
    %cst_64 = arith.constant dense<0.000000e+00> : vector<16x128xf32>
    %180 = tpu.matmul %179, %178, %cst_64 {dimension_numbers = #tpu.dot_dimension_numbers<[1], [0], [0], [1], [0, 0, 1, 1], [], []>} : vector<16x16xbf16>, vector<16x128xbf16>, vector<16x128xf32> -> vector<16x128xf32>
    %c0_65 = arith.constant 0 : index
    %c0_66 = arith.constant 0 : index
    %181 = vector.load %arg14[%c0_65, %c0_66] : memref<16x1xf32, #tpu.memory_space<vmem>>, vector<16x1xf32>
    %182 = vector.broadcast %181 : vector<16x1xf32> to vector<16x128xf32>
    %183 = arith.addf %180, %182 : vector<16x128xf32>
    %cst_67 = arith.constant 2.000000e+01 : f32
    %184 = vector.broadcast %cst_67 : f32 to vector<16x128xf32>
    %185 = arith.minimumf %183, %184 : vector<16x128xf32>
    %186 = math.exp %185 : vector<16x128xf32>
    %cst_68 = arith.constant 1.000000e+00 : f32
    %187 = vector.broadcast %cst_68 : f32 to vector<16x128xf32>
    %188 = arith.addf %187, %186 : vector<16x128xf32>
    %cst_69 = arith.constant 1.000000e+00 : f32
    %189 = vector.broadcast %cst_69 : f32 to vector<16x128xf32>
    %190 = arith.addf %189, %186 : vector<16x128xf32>
    %191 = arith.mulf %188, %190 : vector<16x128xf32>
    %cst_70 = arith.constant 1.000000e+00 : f32
    %192 = vector.broadcast %cst_70 : f32 to vector<16x128xf32>
    %193 = arith.subf %191, %192 : vector<16x128xf32>
    %cst_71 = arith.constant 1.000000e+00 : f32
    %194 = vector.broadcast %cst_71 : f32 to vector<16x128xf32>
    %195 = arith.addf %191, %194 : vector<16x128xf32>
    %196 = tpu.reciprocal %195 {approx = true} : vector<16x128xf32> -> vector<16x128xf32>
    %197 = arith.mulf %193, %196 : vector<16x128xf32>
    %cst_72 = arith.constant 2.000000e+01 : f32
    %198 = vector.broadcast %cst_72 : f32 to vector<16x128xf32>
    %199 = arith.cmpf ogt, %183, %198 : vector<16x128xf32>
    %cst_73 = arith.constant 1.000000e+00 : f32
    %200 = vector.broadcast %cst_73 : f32 to vector<16x128xf32>
    %201 = arith.select %199, %200, %197 : vector<16x128xi1>, vector<16x128xf32>
    %202 = arith.mulf %183, %201 : vector<16x128xf32>
    %c0_74 = arith.constant 0 : index
    %c0_75 = arith.constant 0 : index
    %203 = vector.load %arg15[%c0_74, %c0_75] : memref<16x128xf32, #tpu.memory_space<vmem>>, vector<16x128xf32>
    tpu.vector_store %arg15[%c0_74, %c0_75], %202 {strides = array<i32>} : memref<16x128xf32, #tpu.memory_space<vmem>>, vector<16x128xf32>,
    return
  }
  func.func @transform_0(%arg0: i32) -> (i32, i32) {
    %c0_i32 = arith.constant 0 : i32
    %c0_i32_0 = arith.constant 0 : i32
    return %c0_i32, %arg0 : i32, i32
  }
  func.func @transform_1(%arg0: i32) -> (i32, i32) {
    %c0_i32 = arith.constant 0 : i32
    %c0_i32_0 = arith.constant 0 : i32
    %c0_i32_1 = arith.constant 0 : i32
    return %c0_i32, %c0_i32_0 : i32, i32
  }
  func.func @transform_2(%arg0: i32) -> (i32, i32) {
    %c0_i32 = arith.constant 0 : i32
    %c0_i32_0 = arith.constant 0 : i32
    %c0_i32_1 = arith.constant 0 : i32
    return %c0_i32, %c0_i32_0 : i32, i32
  }
  func.func @transform_3(%arg0: i32) -> (i32, i32) {
    %c0_i32 = arith.constant 0 : i32
    %c0_i32_0 = arith.constant 0 : i32
    %c0_i32_1 = arith.constant 0 : i32
    return %c0_i32, %c0_i32_0 : i32, i32
  }
  func.func @transform_4(%arg0: i32) -> (i32, i32) {
    %c0_i32 = arith.constant 0 : i32
    %c0_i32_0 = arith.constant 0 : i32
    %c0_i32_1 = arith.constant 0 : i32
    return %c0_i32, %c0_i32_0 : i32, i32
  }
  func.func @transform_5(%arg0: i32) -> (i32, i32) {
    %c0_i32 = arith.constant 0 : i32
    %c0_i32_0 = arith.constant 0 : i32
    %c0_i32_1 = arith.constant 0 : i32
    return %c0_i32, %c0_i32_0 : i32, i32
  }
  func.func @transform_6(%arg0: i32) -> (i32, i32) {
    %c0_i32 = arith.constant 0 : i32
    %c0_i32_0 = arith.constant 0 : i32
    %c0_i32_1 = arith.constant 0 : i32
    return %c0_i32, %c0_i32_0 : i32, i32
  }
  func.func @transform_7(%arg0: i32) -> (i32, i32) {
    %c0_i32 = arith.constant 0 : i32
    %c0_i32_0 = arith.constant 0 : i32
    %c0_i32_1 = arith.constant 0 : i32
    return %c0_i32, %c0_i32_0 : i32, i32
  }
  func.func @transform_8(%arg0: i32) -> (i32, i32) {
    %c0_i32 = arith.constant 0 : i32
    %c0_i32_0 = arith.constant 0 : i32
    %c0_i32_1 = arith.constant 0 : i32
    return %c0_i32, %c0_i32_0 : i32, i32
  }
  func.func @transform_9(%arg0: i32) -> (i32, i32) {
    %c0_i32 = arith.constant 0 : i32
    %c0_i32_0 = arith.constant 0 : i32
    %c0_i32_1 = arith.constant 0 : i32
    return %c0_i32, %c0_i32_0 : i32, i32
  }
  func.func @transform_10(%arg0: i32) -> (i32, i32) {
    %c0_i32 = arith.constant 0 : i32
    %c0_i32_0 = arith.constant 0 : i32
    %c0_i32_1 = arith.constant 0 : i32
    return %c0_i32, %c0_i32_0 : i32, i32
  }
  func.func @transform_11(%arg0: i32) -> (i32, i32) {
    %c0_i32 = arith.constant 0 : i32
    %c0_i32_0 = arith.constant 0 : i32
    %c0_i32_1 = arith.constant 0 : i32
    return %c0_i32, %c0_i32_0 : i32, i32
  }
  func.func @transform_12(%arg0: i32) -> (i32, i32) {
    %c0_i32 = arith.constant 0 : i32
    %c0_i32_0 = arith.constant 0 : i32
    %c0_i32_1 = arith.constant 0 : i32
    return %c0_i32, %c0_i32_0 : i32, i32
  }
  func.func @transform_13(%arg0: i32) -> (i32, i32) {
    %c0_i32 = arith.constant 0 : i32
    %c0_i32_0 = arith.constant 0 : i32
    %c0_i32_1 = arith.constant 0 : i32
    return %c0_i32, %c0_i32_0 : i32, i32
  }
  func.func @transform_14(%arg0: i32) -> (i32, i32) {
    %c0_i32 = arith.constant 0 : i32
    %c0_i32_0 = arith.constant 0 : i32
    return %c0_i32, %arg0 : i32, i32
  }
}

</mosaic_0001>

<llo_original>
// kernel: cspnet_forward.3
$region0: #{cspnet_forward.3}
  #allocation0 [shape = 'u32[]', space=smem, size = 0x4, offset = 0x4, fixed_abs, tag = 'smem constant byte address 0x4 - core index']
  #allocation1 [shape = 'u32[144,128]{1,0:T(1,128)}', space=vmem, size = 0x12000, scoped, tag = 'internal scratch']
  %s0 = inlined_call_operand.vmem [shape: bf16[16,128], index: 0, kind: input, shape index: {}]
  %s1 = inlined_call_operand.vmem [shape: bf16[9,128], index: 1, kind: input, shape index: {}]
  %s2 = inlined_call_operand.vmem [shape: bf16[8,16], index: 2, kind: input, shape index: {}]
  %s3 = inlined_call_operand.vmem [shape: f32[8,1], index: 3, kind: input, shape index: {}]
  %s4 = inlined_call_operand.vmem [shape: bf16[8,8], index: 4, kind: input, shape index: {}]
  %s5 = inlined_call_operand.vmem [shape: f32[8,1], index: 5, kind: input, shape index: {}]
  %s6 = inlined_call_operand.vmem [shape: bf16[8,72], index: 6, kind: input, shape index: {}]
  %s7 = inlined_call_operand.vmem [shape: f32[8,1], index: 7, kind: input, shape index: {}]
  %s8 = inlined_call_operand.vmem [shape: bf16[8,8], index: 8, kind: input, shape index: {}]
  %s9 = inlined_call_operand.vmem [shape: f32[8,1], index: 9, kind: input, shape index: {}]
  %s10 = inlined_call_operand.vmem [shape: bf16[8,16], index: 10, kind: input, shape index: {}]
  %s11 = inlined_call_operand.vmem [shape: f32[8,1], index: 11, kind: input, shape index: {}]
  %s12 = inlined_call_operand.vmem [shape: bf16[16,16], index: 12, kind: input, shape index: {}]
  %s13 = inlined_call_operand.vmem [shape: f32[16,1], index: 13, kind: input, shape index: {}]
  %s14 = inlined_call_operand.vmem [shape: f32[16,128], index: 14, kind: output, shape index: {}]
  %s15 = sld [smem:[#allocation0]]
  $region66: #{cspnet_forward.3} parent=0
    _
  %s17 = ssub.s32 1, %s15
  %s18 = scalar_select 0, %s17, %s15
  // Predicated region
  $region2: #{cspnet_forward.3} parent=0 // pred_check
    _
  $region3: #{cspnet_forward.3} parent=0 // pred_check_branch
    %20 = sbr.rel (0) target = $region5
  $region4: #{cspnet_forward.3} parent=0 // pred_region
    _
  $region5: #{cspnet_forward.3} parent=0 // pred_fallthru
    _
  // Predicated region
  $region6: #{cspnet_forward.3} parent=0 // pred_check
    _
  $region7: #{cspnet_forward.3} parent=0 // pred_check_branch
    %22 = sbr.rel (0) target = $region9
  $region8: #{cspnet_forward.3} parent=0 // pred_region
    _
  $region9: #{cspnet_forward.3} parent=0 // pred_fallthru
    _
  // Predicated region
  $region10: #{cspnet_forward.3} parent=0 // pred_check
    _
  $region11: #{cspnet_forward.3} parent=0 // pred_check_branch
    %24 = sbr.rel (0) target = $region13
  $region12: #{cspnet_forward.3} parent=0 // pred_region
    _
  $region13: #{cspnet_forward.3} parent=0 // pred_fallthru
    _
  // Predicated region
  $region14: #{cspnet_forward.3} parent=0 // pred_check
    _
  $region15: #{cspnet_forward.3} parent=0 // pred_check_branch
    %26 = sbr.rel (0) target = $region17
  $region16: #{cspnet_forward.3} parent=0 // pred_region
    _
  $region17: #{cspnet_forward.3} parent=0 // pred_fallthru
    _
  // Predicated region
  $region18: #{cspnet_forward.3} parent=0 // pred_check
    _
  $region19: #{cspnet_forward.3} parent=0 // pred_check_branch
    %28 = sbr.rel (0) target = $region21
  $region20: #{cspnet_forward.3} parent=0 // pred_region
    _
  $region21: #{cspnet_forward.3} parent=0 // pred_fallthru
    _
  // Predicated region
  $region22: #{cspnet_forward.3} parent=0 // pred_check
    _
  $region23: #{cspnet_forward.3} parent=0 // pred_check_branch
    %30 = sbr.rel (0) target = $region25
  $region24: #{cspnet_forward.3} parent=0 // pred_region
    _
  $region25: #{cspnet_forward.3} parent=0 // pred_fallthru
    _
  // Predicated region
  $region26: #{cspnet_forward.3} parent=0 // pred_check
    _
  $region27: #{cspnet_forward.3} parent=0 // pred_check_branch
    %32 = sbr.rel (0) target = $region29
  $region28: #{cspnet_forward.3} parent=0 // pred_region
    _
  $region29: #{cspnet_forward.3} parent=0 // pred_fallthru
    _
  // Predicated region
  $region30: #{cspnet_forward.3} parent=0 // pred_check
    _
  $region31: #{cspnet_forward.3} parent=0 // pred_check_branch
    %34 = sbr.rel (0) target = $region33
  $region32: #{cspnet_forward.3} parent=0 // pred_region
    _
  $region33: #{cspnet_forward.3} parent=0 // pred_fallthru
    _
  // Predicated region
  $region34: #{cspnet_forward.3} parent=0 // pred_check
    _
  $region35: #{cspnet_forward.3} parent=0 // pred_check_branch
    %36 = sbr.rel (0) target = $region37
  $region36: #{cspnet_forward.3} parent=0 // pred_region
    _
  $region37: #{cspnet_forward.3} parent=0 // pred_fallthru
    _
  // Predicated region
  $region38: #{cspnet_forward.3} parent=0 // pred_check
    _
  $region39: #{cspnet_forward.3} parent=0 // pred_check_branch
    %38 = sbr.rel (0) target = $region41
  $region40: #{cspnet_forward.3} parent=0 // pred_region
    _
  $region41: #{cspnet_forward.3} parent=0 // pred_fallthru
    _
  // Predicated region
  $region42: #{cspnet_forward.3} parent=0 // pred_check
    _
  $region43: #{cspnet_forward.3} parent=0 // pred_check_branch
    %40 = sbr.rel (0) target = $region45
  $region44: #{cspnet_forward.3} parent=0 // pred_region
    _
  $region45: #{cspnet_forward.3} parent=0 // pred_fallthru
    _
  // Predicated region
  $region46: #{cspnet_forward.3} parent=0 // pred_check
    _
  $region47: #{cspnet_forward.3} parent=0 // pred_check_branch
    %42 = sbr.rel (0) target = $region49
  $region48: #{cspnet_forward.3} parent=0 // pred_region
    _
  $region49: #{cspnet_forward.3} parent=0 // pred_fallthru
    _
  // Predicated region
  $region50: #{cspnet_forward.3} parent=0 // pred_check
    _
  $region51: #{cspnet_forward.3} parent=0 // pred_check_branch
    %44 = sbr.rel (0) target = $region53
  $region52: #{cspnet_forward.3} parent=0 // pred_region
    _
  $region53: #{cspnet_forward.3} parent=0 // pred_fallthru
    _
  // Predicated region
  $region54: #{cspnet_forward.3} parent=0 // pred_check
    _
  $region55: #{cspnet_forward.3} parent=0 // pred_check_branch
    %46 = sbr.rel (0) target = $region57
  $region56: #{cspnet_forward.3} parent=0 // pred_region
    _
  $region57: #{cspnet_forward.3} parent=0 // pred_fallthru
    _
  %v48 = vld [vmem:[%s1] sm:$0xf]
  %v49 = vld [vmem:[%s1 + $0x4] sm:$0x1]
  %v50 = vld [vmem:[%s0] sm:$0xf]
  %v51 = vld [vmem:[%s0 + $0x4] sm:$0xf]
  %v52 = vld [vmem:[%s2] sm:$0xf]
  %v53 = vld [vmem:[%s3] sm:$0xff]
  %55 = vset.pattern.permute.xlu0 0
  %56 = vperm.xlu0 %55, %v53
  %v57 = vpop.permute.xlu0 %56
  %v61 = vunpack.c.l.b16 %v50
  %v62 = vunpack.c.l.b16 %v51
  %v63 = vpack.c.b16 %v62, %v61
  %vm65 = vcmask 130048
  %v67 = vsel %vm65, %v52, 0
  %69 = vmatprep.subr.bf16.mxu0 0
  %70 = vmatpush1.bf16.msra.mxu0 0
  %71 = vmatprep.subr.bf16.mxu0 0
  %72 = vmatpush1.bf16.msra.mxu0 0
  %73 = vmatprep.subr.bf16.mxu0 0
  %74 = vmatpush1.bf16.msra.mxu0 0
  %75 = vmatprep.subr.bf16.mxu0 0
  %76 = vmatpush1.bf16.msra.mxu0 0
  %77 = vmatprep.subr.bf16.mxu0 0
  %78 = vmatpush1.bf16.msra.mxu0 0
  %79 = vmatprep.subr.bf16.mxu0 0
  %80 = vmatpush1.bf16.msra.mxu0 0
  %81 = vmatprep.subr.bf16.mxu0 0
  %82 = vmatpush1.bf16.msra.mxu0 0
  %83 = vmatprep.subr.bf16.mxu0 0
  %84 = vmatpush1.bf16.msra.mxu0 %v63
  %85 = vmatprep.subr.bf16.mxu0 0
  %86 = vmatpush2.bf16.msra.mxu0 0
  %87 = vmatprep.subr.bf16.mxu0 0
  %88 = vmatpush2.bf16.msra.mxu0 0
  %89 = vmatprep.subr.bf16.mxu0 0
  %90 = vmatpush2.bf16.msra.mxu0 0
  %91 = vmatprep.subr.bf16.mxu0 0
  %92 = vmatpush2.bf16.msra.mxu0 0
  %93 = vmatprep.subr.bf16.mxu0 0
  %94 = vmatpush2.bf16.msra.mxu0 0
  %95 = vmatprep.subr.bf16.mxu0 0
  %96 = vmatpush2.bf16.msra.mxu0 0
  %97 = vmatprep.subr.bf16.mxu0 0
  %98 = vmatpush2.bf16.msra.mxu0 0
  %99 = vmatprep.subr.bf16.mxu0 0
  %100 = vmatpush2.bf16.msra.mxu0 0
  %101 = vmatprep.mubr.bf16.mxu0 0
  %102 = vmatmul.mubr.bf16.gmra.mxu0 %v67
  %v103 = vpop.f32.mrf.mxu0
  %v104 = vadd.f32 %v57, %v103
  %v105 = vpop.f32.mrf.mxu0
  %v106 = vpop.f32.mrf.mxu0
  %v107 = vpop.f32.mrf.mxu0
  %108 = vdwg.mxu0
  %v109 = vmin.f32 %v104, 20.0
  %v110 = vmul.f32 %v109, 1.442695
  %v111 = vpow.pop %v110
  %v112 = vadd.f32 %v111, 1.0
  %v113 = vmul.f32 %v112, %v112
  %v114 = vsub.f32 %v113, 1.0
  %v115 = vadd.f32 %v113, 1.0
  %v116 = vrcp.pop %v115
  %v117 = vmul.f32 %v114, %v116
  %vm118 = vcmp.gt.f32.partialorder %v104, 20.0
  %v119 = vsel %vm118, 1.0, %v117
  %v120 = vmul.f32 %v104, %v119
  %v121 = vpack.c.bf16 %v120, %v120
  %v122 = vld [vmem:[%s4] sm:$0xf]
  %v123 = vld [vmem:[%s5] sm:$0xff]
  %125 = vset.pattern.permute.xlu0 0
  %126 = vperm.xlu0 %125, %v123
  %v127 = vpop.permute.xlu0 %126
  %vm129 = vcmask 64512
  %v131 = vsel %vm129, %v122, 0
  %vm133 = vcmask 1043456
  %v135 = vsel %vm133, %v121, 0
  %137 = vmatprep.subr.bf16.mxu0 0
  %138 = vmatpush1.bf16.msra.mxu0 0
  %139 = vmatprep.subr.bf16.mxu0 0
  %140 = vmatpush1.bf16.msra.mxu0 0
  %141 = vmatprep.subr.bf16.mxu0 0
  %142 = vmatpush1.bf16.msra.mxu0 0
  %143 = vmatprep.subr.bf16.mxu0 0
  %144 = vmatpush1.bf16.msra.mxu0 0
  %145 = vmatprep.subr.bf16.mxu0 0
  %146 = vmatpush1.bf16.msra.mxu0 0
  %147 = vmatprep.subr.bf16.mxu0 0
  %148 = vmatpush1.bf16.msra.mxu0 0
  %149 = vmatprep.subr.bf16.mxu0 0
  %150 = vmatpush1.bf16.msra.mxu0 0
  %151 = vmatprep.subr.bf16.mxu0 0
  %152 = vmatpush1.bf16.msra.mxu0 %v135
  %153 = vmatprep.subr.bf16.mxu0 0
  %154 = vmatpush2.bf16.msra.mxu0 0
  %155 = vmatprep.subr.bf16.mxu0 0
  %156 = vmatpush2.bf16.msra.mxu0 0
  %157 = vmatprep.subr.bf16.mxu0 0
  %158 = vmatpush2.bf16.msra.mxu0 0
  %159 = vmatprep.subr.bf16.mxu0 0
  %160 = vmatpush2.bf16.msra.mxu0 0
  %161 = vmatprep.subr.bf16.mxu0 0
  %162 = vmatpush2.bf16.msra.mxu0 0
  %163 = vmatprep.subr.bf16.mxu0 0
  %164 = vmatpush2.bf16.msra.mxu0 0
  %165 = vmatprep.subr.bf16.mxu0 0
  %166 = vmatpush2.bf16.msra.mxu0 0
  %167 = vmatprep.subr.bf16.mxu0 0
  %168 = vmatpush2.bf16.msra.mxu0 0
  %169 = vmatprep.mubr.bf16.mxu0 0
  %170 = vmatmul.mubr.bf16.gmra.mxu0 %v131
  %v171 = vpop.f32.mrf.mxu0
  %v172 = vadd.f32 %v127, %v171
  %v173 = vpop.f32.mrf.mxu0
  %v174 = vpop.f32.mrf.mxu0
  %v175 = vpop.f32.mrf.mxu0
  %176 = vdwg.mxu0
  %v177 = vmin.f32 %v172, 20.0
  %v178 = vmul.f32 %v177, 1.442695
  %v179 = vpow.pop %v178
  %v180 = vadd.f32 %v179, 1.0
  %v181 = vmul.f32 %v180, %v180
  %v182 = vsub.f32 %v181, 1.0
  %v183 = vadd.f32 %v181, 1.0
  %v184 = vrcp.pop %v183
  %v185 = vmul.f32 %v182, %v184
  %vm186 = vcmp.gt.f32.partialorder %v172, 20.0
  %v187 = vsel %vm186, 1.0, %v185
  %v188 = vmul.f32 %v172, %v187
  %v189 = vpack.c.bf16 %v188, %v188
  %191 = vrot.lane.b32.xlu0 %v189, 9
  %v192 = vpop.permute.xlu0 %191
  %v196 = vpack.i.b16 %v48, %v48
  %v198 = vlaneseq
  %v199 = vshrl.u32 %v198, 7
  %v200 = vsub.s32 0, %v199
  %v201 = vrot.slane %v196, %v200
  %v202 = vmul.bf16 %v192, %v201
  %203 = vrot.lane.b32.xlu0 %v189, 8
  %v204 = vpop.permute.xlu0 %203
  %v207 = vshrl.u32 %v48, 16
  %v208 = vpack.i.b16 %v207, %v207
  %v210 = vlaneseq
  %v211 = vshrl.u32 %v210, 7
  %v212 = vsub.s32 0, %v211
  %v213 = vrot.slane %v208, %v212
  %v214 = vmul.bf16 %v204, %v213
  %215 = vrot.lane.b32.xlu0 %v189, 7
  %v216 = vpop.permute.xlu0 %215
  %v219 = vlaneseq
  %v220 = vshrl.u32 %v219, 7
  %v221 = vsub.s32 1, %v220
  %v222 = vrot.slane %v196, %v221
  %v223 = vmul.bf16 %v216, %v222
  %224 = vrot.lane.b32.xlu0 %v189, 1
  %v225 = vpop.permute.xlu0 %224
  %v228 = vlaneseq
  %v229 = vshrl.u32 %v228, 7
  %v230 = vsub.s32 1, %v229
  %v231 = vrot.slane %v208, %v230
  %v232 = vmul.bf16 %v225, %v231
  %233 = vrot.lane.b32.xlu0 %v189, 127
  %v234 = vpop.permute.xlu0 %233
  %v237 = vlaneseq
  %v238 = vshrl.u32 %v237, 7
  %v239 = vsub.s32 2, %v238
  %v240 = vrot.slane %v208, %v239
  %v241 = vmul.bf16 %v234, %v240
  %242 = vrot.lane.b32.xlu0 %v189, 121
  %v243 = vpop.permute.xlu0 %242
  %v246 = vlaneseq
  %v247 = vshrl.u32 %v246, 7
  %v248 = vsub.s32 3, %v247
  %v249 = vrot.slane %v196, %v248
  %v250 = vmul.bf16 %v243, %v249
  %251 = vrot.lane.b32.xlu0 %v189, 120
  %v252 = vpop.permute.xlu0 %251
  %v255 = vlaneseq
  %v256 = vshrl.u32 %v255, 7
  %v257 = vsub.s32 3, %v256
  %v258 = vrot.slane %v208, %v257
  %v259 = vmul.bf16 %v252, %v258
  %260 = vrot.lane.b32.xlu0 %v189, 119
  %v261 = vpop.permute.xlu0 %260
  %v265 = vpack.i.b16 %v49, %v49
  %v267 = vlaneseq
  %v268 = vshrl.u32 %v267, 7
  %v269 = vsub.s32 0, %v268
  %v270 = vrot.slane %v265, %v269
  %v271 = vmul.bf16 %v261, %v270
  %v273 = vrot.slane %v214, 4
  %v275 = vrot.slane %v232, 4
  %v277 = vrot.slane %v241, 4
  %v279 = vrot.slane %v259, 4
  %v282 = vsel %vm133, %v202, %v273
  %v286 = vsel %vm133, %v223, %v275
  %v290 = vsel %vm133, %v189, %v277
  %v294 = vsel %vm133, %v250, %v279
  %v296 = vld [vmem:[%s6] sm:$0xf]
  %v297 = vld [vmem:[%s7] sm:$0xff]
  %299 = vset.pattern.permute.xlu0 0
  %300 = vperm.xlu0 %299, %v297
  %v301 = vpop.permute.xlu0 %300
  %vm303 = vcmask 588800
  %v305 = vsel %vm303, %v296, 0
  %v308 = vsel %vm133, %v271, 0
  %310 = vmatprep.subr.bf16.mxu0 0
  %311 = vmatpush1.bf16.msra.mxu0 0
  %312 = vmatprep.subr.bf16.mxu0 0
  %313 = vmatpush1.bf16.msra.mxu0 0
  %314 = vmatprep.subr.bf16.mxu0 0
  %315 = vmatpush1.bf16.msra.mxu0 0
  %316 = vmatprep.subr.bf16.mxu0 0
  %317 = vmatpush1.bf16.msra.mxu0 %v308
  %318 = vmatprep.subr.bf16.mxu0 0
  %319 = vmatpush1.bf16.msra.mxu0 %v294
  %320 = vmatprep.subr.bf16.mxu0 0
  %321 = vmatpush1.bf16.msra.mxu0 %v290
  %322 = vmatprep.subr.bf16.mxu0 0
  %323 = vmatpush1.bf16.msra.mxu0 %v286
  %324 = vmatprep.subr.bf16.mxu0 0
  %325 = vmatpush1.bf16.msra.mxu0 %v282
  %326 = vmatprep.subr.bf16.mxu0 0
  %327 = vmatpush2.bf16.msra.mxu0 0
  %328 = vmatprep.subr.bf16.mxu0 0
  %329 = vmatpush2.bf16.msra.mxu0 0
  %330 = vmatprep.subr.bf16.mxu0 0
  %331 = vmatpush2.bf16.msra.mxu0 0
  %332 = vmatprep.subr.bf16.mxu0 0
  %333 = vmatpush2.bf16.msra.mxu0 0
  %334 = vmatprep.subr.bf16.mxu0 0
  %335 = vmatpush2.bf16.msra.mxu0 0
  %336 = vmatprep.subr.bf16.mxu0 0
  %337 = vmatpush2.bf16.msra.mxu0 0
  %338 = vmatprep.subr.bf16.mxu0 0
  %339 = vmatpush2.bf16.msra.mxu0 0
  %340 = vmatprep.subr.bf16.mxu0 0
  %341 = vmatpush2.bf16.msra.mxu0 0
  %342 = vmatprep.mubr.bf16.mxu0 0
  %343 = vmatmul.mubr.bf16.gmra.mxu0 %v305
  %v344 = vpop.f32.mrf.mxu0
  %v345 = vadd.f32 %v301, %v344
  %v346 = vpop.f32.mrf.mxu0
  %v347 = vpop.f32.mrf.mxu0
  %v348 = vpop.f32.mrf.mxu0
  %349 = vdwg.mxu0
  %v350 = vmin.f32 %v345, 20.0
  %v351 = vmul.f32 %v350, 1.442695
  %v352 = vpow.pop %v351
  %v353 = vadd.f32 %v352, 1.0
  %v354 = vmul.f32 %v353, %v353
  %v355 = vsub.f32 %v354, 1.0
  %v356 = vadd.f32 %v354, 1.0
  %v357 = vrcp.pop %v356
  %v358 = vmul.f32 %v355, %v357
  %vm359 = vcmp.gt.f32.partialorder %v345, 20.0
  %v360 = vsel %vm359, 1.0, %v358
  %v361 = vmul.f32 %v345, %v360
  %v362 = vunpack.c.l.bf16 %v121
  %v363 = vadd.f32 %v361, %v362
  %v364 = vpack.c.bf16 %v363, %v363
  %v365 = vld [vmem:[%s8] sm:$0xf]
  %v366 = vld [vmem:[%s9] sm:$0xff]
  %368 = vset.pattern.permute.xlu0 0
  %369 = vperm.xlu0 %368, %v366
  %v370 = vpop.permute.xlu0 %369
  %v373 = vsel %vm129, %v365, 0
  %v376 = vsel %vm133, %v364, 0
  %378 = vmatprep.subr.bf16.mxu0 0
  %379 = vmatpush1.bf16.msra.mxu0 0
  %380 = vmatprep.subr.bf16.mxu0 0
  %381 = vmatpush1.bf16.msra.mxu0 0
  %382 = vmatprep.subr.bf16.mxu0 0
  %383 = vmatpush1.bf16.msra.mxu0 0
  %384 = vmatprep.subr.bf16.mxu0 0
  %385 = vmatpush1.bf16.msra.mxu0 0
  %386 = vmatprep.subr.bf16.mxu0 0
  %387 = vmatpush1.bf16.msra.mxu0 0
  %388 = vmatprep.subr.bf16.mxu0 0
  %389 = vmatpush1.bf16.msra.mxu0 0
  %390 = vmatprep.subr.bf16.mxu0 0
  %391 = vmatpush1.bf16.msra.mxu0 0
  %392 = vmatprep.subr.bf16.mxu0 0
  %393 = vmatpush1.bf16.msra.mxu0 %v376
  %394 = vmatprep.subr.bf16.mxu0 0
  %395 = vmatpush2.bf16.msra.mxu0 0
  %396 = vmatprep.subr.bf16.mxu0 0
  %397 = vmatpush2.bf16.msra.mxu0 0
  %398 = vmatprep.subr.bf16.mxu0 0
  %399 = vmatpush2.bf16.msra.mxu0 0
  %400 = vmatprep.subr.bf16.mxu0 0
  %401 = vmatpush2.bf16.msra.mxu0 0
  %402 = vmatprep.subr.bf16.mxu0 0
  %403 = vmatpush2.bf16.msra.mxu0 0
  %404 = vmatprep.subr.bf16.mxu0 0
  %405 = vmatpush2.bf16.msra.mxu0 0
  %406 = vmatprep.subr.bf16.mxu0 0
  %407 = vmatpush2.bf16.msra.mxu0 0
  %408 = vmatprep.subr.bf16.mxu0 0
  %409 = vmatpush2.bf16.msra.mxu0 0
  %410 = vmatprep.mubr.bf16.mxu0 0
  %411 = vmatmul.mubr.bf16.gmra.mxu0 %v373
  %v412 = vpop.f32.mrf.mxu0
  %v413 = vadd.f32 %v370, %v412
  %v414 = vpop.f32.mrf.mxu0
  %v415 = vpop.f32.mrf.mxu0
  %v416 = vpop.f32.mrf.mxu0
  %417 = vdwg.mxu0
  %v418 = vmin.f32 %v413, 20.0
  %v419 = vmul.f32 %v418, 1.442695
  %v420 = vpow.pop %v419
  %v421 = vadd.f32 %v420, 1.0
  %v422 = vmul.f32 %v421, %v421
  %v423 = vsub.f32 %v422, 1.0
  %v424 = vadd.f32 %v422, 1.0
  %v425 = vrcp.pop %v424
  %v426 = vmul.f32 %v423, %v425
  %vm427 = vcmp.gt.f32.partialorder %v413, 20.0
  %v428 = vsel %vm427, 1.0, %v426
  %v429 = vmul.f32 %v413, %v428
  %v430 = vpack.c.bf16 %v429, %v429
  %v431 = vld [vmem:[%s10] sm:$0xf]
  %v432 = vld [vmem:[%s11] sm:$0xff]
  %434 = vset.pattern.permute.xlu0 0
  %435 = vperm.xlu0 %434, %v432
  %v436 = vpop.permute.xlu0 %435
  %v439 = vsel %vm65, %v431, 0
  %441 = vmatprep.subr.bf16.mxu0 0
  %442 = vmatpush1.bf16.msra.mxu0 0
  %443 = vmatprep.subr.bf16.mxu0 0
  %444 = vmatpush1.bf16.msra.mxu0 0
  %445 = vmatprep.subr.bf16.mxu0 0
  %446 = vmatpush1.bf16.msra.mxu0 0
  %447 = vmatprep.subr.bf16.mxu0 0
  %448 = vmatpush1.bf16.msra.mxu0 0
  %449 = vmatprep.subr.bf16.mxu0 0
  %450 = vmatpush1.bf16.msra.mxu0 0
  %451 = vmatprep.subr.bf16.mxu0 0
  %452 = vmatpush1.bf16.msra.mxu0 0
  %453 = vmatprep.subr.bf16.mxu0 0
  %454 = vmatpush1.bf16.msra.mxu0 0
  %455 = vmatprep.subr.bf16.mxu0 0
  %456 = vmatpush1.bf16.msra.mxu0 %v63
  %457 = vmatprep.subr.bf16.mxu0 0
  %458 = vmatpush2.bf16.msra.mxu0 0
  %459 = vmatprep.subr.bf16.mxu0 0
  %460 = vmatpush2.bf16.msra.mxu0 0
  %461 = vmatprep.subr.bf16.mxu0 0
  %462 = vmatpush2.bf16.msra.mxu0 0
  %463 = vmatprep.subr.bf16.mxu0 0
  %464 = vmatpush2.bf16.msra.mxu0 0
  %465 = vmatprep.subr.bf16.mxu0 0
  %466 = vmatpush2.bf16.msra.mxu0 0
  %467 = vmatprep.subr.bf16.mxu0 0
  %468 = vmatpush2.bf16.msra.mxu0 0
  %469 = vmatprep.subr.bf16.mxu0 0
  %470 = vmatpush2.bf16.msra.mxu0 0
  %471 = vmatprep.subr.bf16.mxu0 0
  %472 = vmatpush2.bf16.msra.mxu0 0
  %473 = vmatprep.mubr.bf16.mxu0 0
  %474 = vmatmul.mubr.bf16.gmra.mxu0 %v439
  %v475 = vpop.f32.mrf.mxu0
  %v476 = vadd.f32 %v436, %v475
  %v477 = vpop.f32.mrf.mxu0
  %v478 = vpop.f32.mrf.mxu0
  %v479 = vpop.f32.mrf.mxu0
  %480 = vdwg.mxu0
  %v481 = vmin.f32 %v476, 20.0
  %v482 = vmul.f32 %v481, 1.442695
  %v483 = vpow.pop %v482
  %v484 = vadd.f32 %v483, 1.0
  %v485 = vmul.f32 %v484, %v484
  %v486 = vsub.f32 %v485, 1.0
  %v487 = vadd.f32 %v485, 1.0
  %v488 = vrcp.pop %v487
  %v489 = vmul.f32 %v486, %v488
  %vm490 = vcmp.gt.f32.partialorder %v476, 20.0
  %v491 = vsel %vm490, 1.0, %v489
  %v492 = vmul.f32 %v476, %v491
  %v493 = vpack.c.bf16 %v492, %v492
  %v495 = vrot.slane %v493, 4
  %v498 = vsel %vm133, %v430, %v495
  %v500 = vld [vmem:[%s12] sm:$0xf]
  %v501 = vld [vmem:[%s12 + $0x4] sm:$0xf]
  %v502 = vld [vmem:[%s13] sm:$0xff]
  %v503 = vld [vmem:[%s13 + $0x8] sm:$0xff]
  %505 = vset.pattern.permute.xlu0 0
  %506 = vperm.xlu0 %505, %v502
  %v507 = vpop.permute.xlu0 %506
  %510 = vset.pattern.permute.xlu0 0
  %511 = vperm.xlu0 %510, %v503
  %v512 = vpop.permute.xlu0 %511
  %v516 = vunpack.c.l.b16 %v500
  %v517 = vunpack.c.l.b16 %v501
  %v518 = vpack.c.b16 %v517, %v516
  %v520 = vsel %vm65, %v518, 0
  %522 = vmatprep.subr.bf16.mxu0 0
  %523 = vmatpush1.bf16.msra.mxu0 0
  %524 = vmatprep.subr.bf16.mxu0 0
  %525 = vmatpush1.bf16.msra.mxu0 0
  %526 = vmatprep.subr.bf16.mxu0 0
  %527 = vmatpush1.bf16.msra.mxu0 0
  %528 = vmatprep.subr.bf16.mxu0 0
  %529 = vmatpush1.bf16.msra.mxu0 0
  %530 = vmatprep.subr.bf16.mxu0 0
  %531 = vmatpush1.bf16.msra.mxu0 0
  %532 = vmatprep.subr.bf16.mxu0 0
  %533 = vmatpush1.bf16.msra.mxu0 0
  %534 = vmatprep.subr.bf16.mxu0 0
  %535 = vmatpush1.bf16.msra.mxu0 0
  %536 = vmatprep.subr.bf16.mxu0 0
  %537 = vmatpush1.bf16.msra.mxu0 %v498
  %538 = vmatprep.subr.bf16.mxu0 0
  %539 = vmatpush2.bf16.msra.mxu0 0
  %540 = vmatprep.subr.bf16.mxu0 0
  %541 = vmatpush2.bf16.msra.mxu0 0
  %542 = vmatprep.subr.bf16.mxu0 0
  %543 = vmatpush2.bf16.msra.mxu0 0
  %544 = vmatprep.subr.bf16.mxu0 0
  %545 = vmatpush2.bf16.msra.mxu0 0
  %546 = vmatprep.subr.bf16.mxu0 0
  %547 = vmatpush2.bf16.msra.mxu0 0
  %548 = vmatprep.subr.bf16.mxu0 0
  %549 = vmatpush2.bf16.msra.mxu0 0
  %550 = vmatprep.subr.bf16.mxu0 0
  %551 = vmatpush2.bf16.msra.mxu0 0
  %552 = vmatprep.subr.bf16.mxu0 0
  %553 = vmatpush2.bf16.msra.mxu0 0
  %554 = vmatprep.mubr.bf16.mxu0 0
  %555 = vmatmul.mubr.bf16.gmra.mxu0 %v520
  %v556 = vpop.f32.mrf.mxu0
  %v557 = vadd.f32 %v507, %v556
  %v558 = vpop.f32.mrf.mxu0
  %v559 = vpop.f32.mrf.mxu0
  %v560 = vadd.f32 %v512, %v559
  %v561 = vpop.f32.mrf.mxu0
  %562 = vdwg.mxu0
  %v563 = vmin.f32 %v557, 20.0
  %v564 = vmin.f32 %v560, 20.0
  %v565 = vmul.f32 %v563, 1.442695
  %v566 = vpow.pop %v565
  %v567 = vmul.f32 %v564, 1.442695
  %v568 = vpow.pop %v567
  %v569 = vadd.f32 %v566, 1.0
  %v570 = vadd.f32 %v568, 1.0
  %v571 = vmul.f32 %v569, %v569
  %v572 = vmul.f32 %v570, %v570
  %v573 = vsub.f32 %v571, 1.0
  %v574 = vsub.f32 %v572, 1.0
  %v575 = vadd.f32 %v571, 1.0
  %v576 = vadd.f32 %v572, 1.0
  %v577 = vrcp.pop %v575
  %v578 = vrcp.pop %v576
  %v579 = vmul.f32 %v573, %v577
  %v580 = vmul.f32 %v574, %v578
  %vm581 = vcmp.gt.f32.partialorder %v557, 20.0
  %vm582 = vcmp.gt.f32.partialorder %v560, 20.0
  %v583 = vsel %vm581, 1.0, %v579
  %v584 = vsel %vm582, 1.0, %v580
  %v585 = vmul.f32 %v557, %v583
  %v586 = vmul.f32 %v560, %v584
  %587 = vst [vmem:[%s14] sm:$0xff] %v585
  %588 = vst [vmem:[%s14 + $0x8] sm:$0xff] %v586
  // Predicated region
  $region58: #{cspnet_forward.3} parent=0 // pred_check
    _
  $region59: #{cspnet_forward.3} parent=0 // pred_check_branch
    %590 = sbr.rel (0) target = $region61
  $region60: #{cspnet_forward.3} parent=0 // pred_region
    _
  $region61: #{cspnet_forward.3} parent=0 // pred_fallthru
    _
  // Predicated region
  $region62: #{cspnet_forward.3} parent=0 // pred_check
    _
  $region63: #{cspnet_forward.3} parent=0 // pred_check_branch
    %592 = sbr.rel (0) target = $region65
  $region64: #{cspnet_forward.3} parent=0 // pred_region
    _
  $region65: #{cspnet_forward.3} parent=0 // pred_fallthru
    _

// kernel: cspnet_forward.2
$region0: #{cspnet_forward.2}
  #allocation0 [shape = 'u32[]', space=smem, size = 0x4, offset = 0x4, fixed_abs, tag = 'smem constant byte address 0x4 - core index']
  #allocation1 [shape = 'u32[144,128]{1,0:T(1,128)}', space=vmem, size = 0x12000, scoped, tag = 'internal scratch']
  %s0 = inlined_call_operand.vmem [shape: bf16[2,4,4,9,9], index: 0, kind: input, shape index: {}]
  %s1 = inlined_call_operand.vmem [shape: bf16[16,36], index: 1, kind: input, shape index: {}]
  %s2 = inlined_call_operand.vmem [shape: f32[16,1], index: 2, kind: input, shape index: {}]
  %s3 = inlined_call_operand.vmem [shape: bf16[16,128], index: 3, kind: output, shape index: {}]
  %s4 = sld [smem:[#allocation0]]
  $region22: #{cspnet_forward.2} parent=0
    _
  %s6 = ssub.s32 1, %s4
  %s7 = scalar_select 0, %s6, %s4
  // Predicated region
  $region2: #{cspnet_forward.2} parent=0 // pred_check
    _
  $region3: #{cspnet_forward.2} parent=0 // pred_check_branch
    %9 = sbr.rel (0) target = $region5
  $region4: #{cspnet_forward.2} parent=0 // pred_region
    _
  $region5: #{cspnet_forward.2} parent=0 // pred_fallthru
    _
  // Predicated region
  $region6: #{cspnet_forward.2} parent=0 // pred_check
    _
  $region7: #{cspnet_forward.2} parent=0 // pred_check_branch
    %11 = sbr.rel (0) target = $region9
  $region8: #{cspnet_forward.2} parent=0 // pred_region
    _
  $region9: #{cspnet_forward.2} parent=0 // pred_fallthru
    _
  // Predicated region
  $region10: #{cspnet_forward.2} parent=0 // pred_check
    _
  $region11: #{cspnet_forward.2} parent=0 // pred_check_branch
    %13 = sbr.rel (0) target = $region13
  $region12: #{cspnet_forward.2} parent=0 // pred_region
    _
  $region13: #{cspnet_forward.2} parent=0 // pred_fallthru
    _
  %v15 = vld [vmem:[%s0] sm:$0xf]
  %v16 = vld [vmem:[%s0 + $0x8] sm:$0xf]
  %v17 = vld [vmem:[%s0 + $0x10] sm:$0xf]
  %v18 = vld [vmem:[%s0 + $0x18] sm:$0xf]
  %s19 = scalar_lea.vmem %s0, 32
  %v20 = vld [vmem:[%s19] sm:$0xf]
  %v21 = vld [vmem:[%s19 + $0x8] sm:$0xf]
  %v22 = vld [vmem:[%s19 + $0x10] sm:$0xf]
  %v23 = vld [vmem:[%s19 + $0x18] sm:$0xf]
  %s24 = scalar_lea.vmem %s0, 64
  %v25 = vld [vmem:[%s24] sm:$0xf]
  %v26 = vld [vmem:[%s24 + $0x8] sm:$0xf]
  %v27 = vld [vmem:[%s24 + $0x10] sm:$0xf]
  %v28 = vld [vmem:[%s24 + $0x18] sm:$0xf]
  %s29 = scalar_lea.vmem %s0, 96
  %v30 = vld [vmem:[%s29] sm:$0xf]
  %v31 = vld [vmem:[%s29 + $0x8] sm:$0xf]
  %v32 = vld [vmem:[%s29 + $0x10] sm:$0xf]
  %v33 = vld [vmem:[%s29 + $0x18] sm:$0xf]
  %v34 = vld [vmem:[%s0 + $0x4] sm:$0x1]
  %v35 = vld [vmem:[%s0 + $0xc] sm:$0x1]
  %v36 = vld [vmem:[%s0 + $0x14] sm:$0x1]
  %v37 = vld [vmem:[%s0 + $0x1c] sm:$0x1]
  %v38 = vld [vmem:[%s19 + $0x4] sm:$0x1]
  %v39 = vld [vmem:[%s19 + $0xc] sm:$0x1]
  %v40 = vld [vmem:[%s19 + $0x14] sm:$0x1]
  %v41 = vld [vmem:[%s19 + $0x1c] sm:$0x1]
  %46 = vrot.lane.b32.xlu0 %v15, 127
  %v47 = vpop.permute.xlu0 %46
  %48 = vrot.lane.b32.xlu0 %v16, 127
  %v49 = vpop.permute.xlu0 %48
  %50 = vrot.lane.b32.xlu0 %v17, 127
  %v51 = vpop.permute.xlu0 %50
  %52 = vrot.lane.b32.xlu0 %v18, 127
  %v53 = vpop.permute.xlu0 %52
  %58 = vrot.lane.b32.xlu0 %v25, 127
  %v59 = vpop.permute.xlu0 %58
  %60 = vrot.lane.b32.xlu0 %v26, 127
  %v61 = vpop.permute.xlu0 %60
  %62 = vrot.lane.b32.xlu0 %v27, 127
  %v63 = vpop.permute.xlu0 %62
  %64 = vrot.lane.b32.xlu0 %v28, 127
  %v65 = vpop.permute.xlu0 %64
  %vm66 = vsmask.f32 3328
  %vm67 = vsmask.f32 7440
  %vm68 = vmor %vm66, %vm67
  %v70 = vshrl.u32 %v15, 16
  %v72 = vrot.slane %v70, 4
  %v73 = vshll.u32 %v15, 16
  %v75 = vrot.slane %v73, 5
  %v76 = vor.u32 %v72, %v75
  %v77 = vrot.slane %v76, 4
  %v79 = vshll.u32 %v34, 16
  %v81 = vrot.slane %v79, 5
  %v82 = vsel %vm68, %v77, %v81
  %v84 = vshrl.u32 %v16, 16
  %v86 = vrot.slane %v84, 4
  %v87 = vshll.u32 %v16, 16
  %v89 = vrot.slane %v87, 5
  %v90 = vor.u32 %v86, %v89
  %v91 = vrot.slane %v90, 4
  %v93 = vshll.u32 %v35, 16
  %v95 = vrot.slane %v93, 5
  %v96 = vsel %vm68, %v91, %v95
  %v98 = vshrl.u32 %v17, 16
  %v100 = vrot.slane %v98, 4
  %v101 = vshll.u32 %v17, 16
  %v103 = vrot.slane %v101, 5
  %v104 = vor.u32 %v100, %v103
  %v105 = vrot.slane %v104, 4
  %v107 = vshll.u32 %v36, 16
  %v109 = vrot.slane %v107, 5
  %v110 = vsel %vm68, %v105, %v109
  %v112 = vshrl.u32 %v18, 16
  %v114 = vrot.slane %v112, 4
  %v115 = vshll.u32 %v18, 16
  %v117 = vrot.slane %v115, 5
  %v118 = vor.u32 %v114, %v117
  %v119 = vrot.slane %v118, 4
  %v121 = vshll.u32 %v37, 16
  %v123 = vrot.slane %v121, 5
  %v124 = vsel %vm68, %v119, %v123
  %v126 = vshrl.u32 %v20, 16
  %v128 = vrot.slane %v126, 4
  %v129 = vshll.u32 %v20, 16
  %v131 = vrot.slane %v129, 5
  %v132 = vor.u32 %v128, %v131
  %v133 = vrot.slane %v132, 4
  %v135 = vshll.u32 %v38, 16
  %v137 = vrot.slane %v135, 5
  %v138 = vsel %vm68, %v133, %v137
  %v140 = vshrl.u32 %v21, 16
  %v142 = vrot.slane %v140, 4
  %v143 = vshll.u32 %v21, 16
  %v145 = vrot.slane %v143, 5
  %v146 = vor.u32 %v142, %v145
  %v147 = vrot.slane %v146, 4
  %v149 = vshll.u32 %v39, 16
  %v151 = vrot.slane %v149, 5
  %v152 = vsel %vm68, %v147, %v151
  %v154 = vshrl.u32 %v22, 16
  %v156 = vrot.slane %v154, 4
  %v157 = vshll.u32 %v22, 16
  %v159 = vrot.slane %v157, 5
  %v160 = vor.u32 %v156, %v159
  %v161 = vrot.slane %v160, 4
  %v163 = vshll.u32 %v40, 16
  %v165 = vrot.slane %v163, 5
  %v166 = vsel %vm68, %v161, %v165
  %v168 = vshrl.u32 %v23, 16
  %v170 = vrot.slane %v168, 4
  %v171 = vshll.u32 %v23, 16
  %v173 = vrot.slane %v171, 5
  %v174 = vor.u32 %v170, %v173
  %v175 = vrot.slane %v174, 4
  %v177 = vshll.u32 %v41, 16
  %v179 = vrot.slane %v177, 5
  %v180 = vsel %vm68, %v175, %v179
  %181 = vrot.lane.b32.xlu0 %v82, 127
  %v182 = vpop.permute.xlu0 %181
  %183 = vrot.lane.b32.xlu0 %v96, 127
  %v184 = vpop.permute.xlu0 %183
  %185 = vrot.lane.b32.xlu0 %v110, 127
  %v186 = vpop.permute.xlu0 %185
  %187 = vrot.lane.b32.xlu0 %v124, 127
  %v188 = vpop.permute.xlu0 %187
  %v189 = vpack.i.b16 %v16, %v15
  %v191 = vpack.i.b16 %v84, %v70
  %v193 = vpack.i.b16 %v18, %v17
  %v195 = vpack.i.b16 %v112, %v98
  %v197 = vpack.i.b16 %v21, %v20
  %v199 = vpack.i.b16 %v140, %v126
  %v201 = vpack.i.b16 %v23, %v22
  %v203 = vpack.i.b16 %v168, %v154
  %v207 = vpack.i.b16 %v49, %v47
  %v209 = vshrl.u32 %v47, 16
  %v210 = vshrl.u32 %v49, 16
  %v211 = vpack.i.b16 %v210, %v209
  %v215 = vpack.i.b16 %v53, %v51
  %v217 = vshrl.u32 %v51, 16
  %v218 = vshrl.u32 %v53, 16
  %v219 = vpack.i.b16 %v218, %v217
  %v223 = vpack.i.b16 %v26, %v25
  %v225 = vshrl.u32 %v25, 16
  %v226 = vshrl.u32 %v26, 16
  %v227 = vpack.i.b16 %v226, %v225
  %v231 = vpack.i.b16 %v28, %v27
  %v233 = vshrl.u32 %v27, 16
  %v234 = vshrl.u32 %v28, 16
  %v235 = vpack.i.b16 %v234, %v233
  %v239 = vpack.i.b16 %v31, %v30
  %v241 = vshrl.u32 %v30, 16
  %v242 = vshrl.u32 %v31, 16
  %v243 = vpack.i.b16 %v242, %v241
  %v247 = vpack.i.b16 %v33, %v32
  %v249 = vshrl.u32 %v32, 16
  %v250 = vshrl.u32 %v33, 16
  %v251 = vpack.i.b16 %v250, %v249
  %v255 = vpack.i.b16 %v61, %v59
  %v257 = vshrl.u32 %v59, 16
  %v258 = vshrl.u32 %v61, 16
  %v259 = vpack.i.b16 %v258, %v257
  %v263 = vpack.i.b16 %v65, %v63
  %v265 = vshrl.u32 %v63, 16
  %v266 = vshrl.u32 %v65, 16
  %v267 = vpack.i.b16 %v266, %v265
  %v271 = vpack.i.b16 %v96, %v82
  %v273 = vshrl.u32 %v82, 16
  %v274 = vshrl.u32 %v96, 16
  %v275 = vpack.i.b16 %v274, %v273
  %v279 = vpack.i.b16 %v124, %v110
  %v281 = vshrl.u32 %v110, 16
  %v282 = vshrl.u32 %v124, 16
  %v283 = vpack.i.b16 %v282, %v281
  %v287 = vpack.i.b16 %v152, %v138
  %v289 = vshrl.u32 %v138, 16
  %v290 = vshrl.u32 %v152, 16
  %v291 = vpack.i.b16 %v290, %v289
  %v295 = vpack.i.b16 %v180, %v166
  %v297 = vshrl.u32 %v166, 16
  %v298 = vshrl.u32 %v180, 16
  %v299 = vpack.i.b16 %v298, %v297
  %v303 = vpack.i.b16 %v184, %v182
  %v304 = vshrl.u32 %v182, 16
  %v305 = vshrl.u32 %v184, 16
  %v306 = vpack.i.b16 %v305, %v304
  %v309 = vpack.i.b16 %v188, %v186
  %v310 = vshrl.u32 %v186, 16
  %v311 = vshrl.u32 %v188, 16
  %v312 = vpack.i.b16 %v311, %v310
  %v313 = vcombine.low %v189, %v197
  %v315 = vunpack.c.l.s4 1983009808
  %v316 = vunpack.c.0.s8 %v315
  %v317 = vlaneseq
  %v318 = vshrl.u32 %v317, 7
  %v319 = vsub.s32 %v316, %v318
  %v320 = vrot.slane %v313, %v319
  %v321 = vcombine.low %v193, %v201
  %v323 = vunpack.c.l.s4 1983009808
  %v324 = vunpack.c.0.s8 %v323
  %v325 = vlaneseq
  %v326 = vshrl.u32 %v325, 7
  %v327 = vsub.s32 %v324, %v326
  %v328 = vrot.slane %v321, %v327
  %v329 = vcombine.low %v320, %v328
  %v330 = vcombine.high %v320, %v328
  %v332 = vunpack.c.l.s4 1934713408
  %v333 = vunpack.c.0.s8 %v332
  %v334 = vlaneseq
  %v335 = vshrl.u32 %v334, 7
  %v336 = vsub.s32 %v333, %v335
  %v337 = vrot.slane %v329, %v336
  %v339 = vunpack.c.l.s4 1934713408
  %v340 = vunpack.c.0.s8 %v339
  %v341 = vlaneseq
  %v342 = vshrl.u32 %v341, 7
  %v343 = vsub.s32 %v340, %v342
  %v344 = vrot.slane %v330, %v343
  %v345 = vcombine.high %v337, 0
  %v346 = vcombine.high %v344, 0
  %v347 = vcombine.low %v191, %v199
  %v349 = vunpack.c.l.s4 1983009808
  %v350 = vunpack.c.0.s8 %v349
  %v351 = vlaneseq
  %v352 = vshrl.u32 %v351, 7
  %v353 = vsub.s32 %v350, %v352
  %v354 = vrot.slane %v347, %v353
  %v355 = vcombine.low %v195, %v203
  %v357 = vunpack.c.l.s4 1983009808
  %v358 = vunpack.c.0.s8 %v357
  %v359 = vlaneseq
  %v360 = vshrl.u32 %v359, 7
  %v361 = vsub.s32 %v358, %v360
  %v362 = vrot.slane %v355, %v361
  %v363 = vcombine.low %v354, %v362
  %v364 = vcombine.high %v354, %v362
  %v366 = vunpack.c.l.s4 1934713408
  %v367 = vunpack.c.0.s8 %v366
  %v368 = vlaneseq
  %v369 = vshrl.u32 %v368, 7
  %v370 = vsub.s32 %v367, %v369
  %v371 = vrot.slane %v363, %v370
  %v373 = vunpack.c.l.s4 1934713408
  %v374 = vunpack.c.0.s8 %v373
  %v375 = vlaneseq
  %v376 = vshrl.u32 %v375, 7
  %v377 = vsub.s32 %v374, %v376
  %v378 = vrot.slane %v364, %v377
  %v379 = vcombine.high %v371, 0
  %v380 = vcombine.high %v378, 0
  %v381 = vcombine.low %v207, %v223
  %v383 = vunpack.c.l.s4 1983009808
  %v384 = vunpack.c.0.s8 %v383
  %v385 = vlaneseq
  %v386 = vshrl.u32 %v385, 7
  %v387 = vsub.s32 %v384, %v386
  %v388 = vrot.slane %v381, %v387
  %v389 = vcombine.low %v215, %v231
  %v391 = vunpack.c.l.s4 1983009808
  %v392 = vunpack.c.0.s8 %v391
  %v393 = vlaneseq
  %v394 = vshrl.u32 %v393, 7
  %v395 = vsub.s32 %v392, %v394
  %v396 = vrot.slane %v389, %v395
  %v397 = vcombine.low %v388, %v396
  %v398 = vcombine.high %v388, %v396
  %v400 = vunpack.c.l.s4 1934713408
  %v401 = vunpack.c.0.s8 %v400
  %v402 = vlaneseq
  %v403 = vshrl.u32 %v402, 7
  %v404 = vsub.s32 %v401, %v403
  %v405 = vrot.slane %v397, %v404
  %v407 = vunpack.c.l.s4 1934713408
  %v408 = vunpack.c.0.s8 %v407
  %v409 = vlaneseq
  %v410 = vshrl.u32 %v409, 7
  %v411 = vsub.s32 %v408, %v410
  %v412 = vrot.slane %v398, %v411
  %v413 = vcombine.high %v405, 0
  %v414 = vcombine.high %v412, 0
  %v415 = vcombine.low %v211, %v227
  %v417 = vunpack.c.l.s4 1983009808
  %v418 = vunpack.c.0.s8 %v417
  %v419 = vlaneseq
  %v420 = vshrl.u32 %v419, 7
  %v421 = vsub.s32 %v418, %v420
  %v422 = vrot.slane %v415, %v421
  %v423 = vcombine.low %v219, %v235
  %v425 = vunpack.c.l.s4 1983009808
  %v426 = vunpack.c.0.s8 %v425
  %v427 = vlaneseq
  %v428 = vshrl.u32 %v427, 7
  %v429 = vsub.s32 %v426, %v428
  %v430 = vrot.slane %v423, %v429
  %v431 = vcombine.low %v422, %v430
  %v432 = vcombine.high %v422, %v430
  %v434 = vunpack.c.l.s4 1934713408
  %v435 = vunpack.c.0.s8 %v434
  %v436 = vlaneseq
  %v437 = vshrl.u32 %v436, 7
  %v438 = vsub.s32 %v435, %v437
  %v439 = vrot.slane %v431, %v438
  %v441 = vunpack.c.l.s4 1934713408
  %v442 = vunpack.c.0.s8 %v441
  %v443 = vlaneseq
  %v444 = vshrl.u32 %v443, 7
  %v445 = vsub.s32 %v442, %v444
  %v446 = vrot.slane %v432, %v445
  %v447 = vcombine.high %v439, 0
  %v448 = vcombine.high %v446, 0
  %v449 = vcombine.low %v239, %v255
  %v451 = vunpack.c.l.s4 1983009808
  %v452 = vunpack.c.0.s8 %v451
  %v453 = vlaneseq
  %v454 = vshrl.u32 %v453, 7
  %v455 = vsub.s32 %v452, %v454
  %v456 = vrot.slane %v449, %v455
  %v457 = vcombine.low %v247, %v263
  %v459 = vunpack.c.l.s4 1983009808
  %v460 = vunpack.c.0.s8 %v459
  %v461 = vlaneseq
  %v462 = vshrl.u32 %v461, 7
  %v463 = vsub.s32 %v460, %v462
  %v464 = vrot.slane %v457, %v463
  %v465 = vcombine.low %v456, %v464
  %v466 = vcombine.high %v456, %v464
  %v468 = vunpack.c.l.s4 1934713408
  %v469 = vunpack.c.0.s8 %v468
  %v470 = vlaneseq
  %v471 = vshrl.u32 %v470, 7
  %v472 = vsub.s32 %v469, %v471
  %v473 = vrot.slane %v465, %v472
  %v475 = vunpack.c.l.s4 1934713408
  %v476 = vunpack.c.0.s8 %v475
  %v477 = vlaneseq
  %v478 = vshrl.u32 %v477, 7
  %v479 = vsub.s32 %v476, %v478
  %v480 = vrot.slane %v466, %v479
  %v481 = vcombine.high %v473, 0
  %v482 = vcombine.high %v480, 0
  %v483 = vcombine.low %v243, %v259
  %v485 = vunpack.c.l.s4 1983009808
  %v486 = vunpack.c.0.s8 %v485
  %v487 = vlaneseq
  %v488 = vshrl.u32 %v487, 7
  %v489 = vsub.s32 %v486, %v488
  %v490 = vrot.slane %v483, %v489
  %v491 = vcombine.low %v251, %v267
  %v493 = vunpack.c.l.s4 1983009808
  %v494 = vunpack.c.0.s8 %v493
  %v495 = vlaneseq
  %v496 = vshrl.u32 %v495, 7
  %v497 = vsub.s32 %v494, %v496
  %v498 = vrot.slane %v491, %v497
  %v499 = vcombine.low %v490, %v498
  %v500 = vcombine.high %v490, %v498
  %v502 = vunpack.c.l.s4 1934713408
  %v503 = vunpack.c.0.s8 %v502
  %v504 = vlaneseq
  %v505 = vshrl.u32 %v504, 7
  %v506 = vsub.s32 %v503, %v505
  %v507 = vrot.slane %v499, %v506
  %v509 = vunpack.c.l.s4 1934713408
  %v510 = vunpack.c.0.s8 %v509
  %v511 = vlaneseq
  %v512 = vshrl.u32 %v511, 7
  %v513 = vsub.s32 %v510, %v512
  %v514 = vrot.slane %v500, %v513
  %v515 = vcombine.high %v507, 0
  %v516 = vcombine.high %v514, 0
  %v517 = vcombine.low %v271, %v287
  %v519 = vunpack.c.l.s4 1983009808
  %v520 = vunpack.c.0.s8 %v519
  %v521 = vlaneseq
  %v522 = vshrl.u32 %v521, 7
  %v523 = vsub.s32 %v520, %v522
  %v524 = vrot.slane %v517, %v523
  %v525 = vcombine.low %v279, %v295
  %v527 = vunpack.c.l.s4 1983009808
  %v528 = vunpack.c.0.s8 %v527
  %v529 = vlaneseq
  %v530 = vshrl.u32 %v529, 7
  %v531 = vsub.s32 %v528, %v530
  %v532 = vrot.slane %v525, %v531
  %v533 = vcombine.low %v524, %v532
  %v534 = vcombine.high %v524, %v532
  %v536 = vunpack.c.l.s4 1934713408
  %v537 = vunpack.c.0.s8 %v536
  %v538 = vlaneseq
  %v539 = vshrl.u32 %v538, 7
  %v540 = vsub.s32 %v537, %v539
  %v541 = vrot.slane %v533, %v540
  %v543 = vunpack.c.l.s4 1934713408
  %v544 = vunpack.c.0.s8 %v543
  %v545 = vlaneseq
  %v546 = vshrl.u32 %v545, 7
  %v547 = vsub.s32 %v544, %v546
  %v548 = vrot.slane %v534, %v547
  %v549 = vcombine.high %v541, 0
  %v550 = vcombine.high %v548, 0
  %v551 = vcombine.low %v275, %v291
  %v553 = vunpack.c.l.s4 1983009808
  %v554 = vunpack.c.0.s8 %v553
  %v555 = vlaneseq
  %v556 = vshrl.u32 %v555, 7
  %v557 = vsub.s32 %v554, %v556
  %v558 = vrot.slane %v551, %v557
  %v559 = vcombine.low %v283, %v299
  %v561 = vunpack.c.l.s4 1983009808
  %v562 = vunpack.c.0.s8 %v561
  %v563 = vlaneseq
  %v564 = vshrl.u32 %v563, 7
  %v565 = vsub.s32 %v562, %v564
  %v566 = vrot.slane %v559, %v565
  %v567 = vcombine.low %v558, %v566
  %v568 = vcombine.high %v558, %v566
  %v570 = vunpack.c.l.s4 1934713408
  %v571 = vunpack.c.0.s8 %v570
  %v572 = vlaneseq
  %v573 = vshrl.u32 %v572, 7
  %v574 = vsub.s32 %v571, %v573
  %v575 = vrot.slane %v567, %v574
  %v577 = vunpack.c.l.s4 1934713408
  %v578 = vunpack.c.0.s8 %v577
  %v579 = vlaneseq
  %v580 = vshrl.u32 %v579, 7
  %v581 = vsub.s32 %v578, %v580
  %v582 = vrot.slane %v568, %v581
  %v583 = vcombine.high %v575, 0
  %v584 = vcombine.high %v582, 0
  %v587 = vunpack.c.l.s4 1983009808
  %v588 = vunpack.c.0.s8 %v587
  %v589 = vlaneseq
  %v590 = vshrl.u32 %v589, 7
  %v591 = vsub.s32 %v588, %v590
  %v592 = vrot.slane %v303, %v591
  %v595 = vunpack.c.l.s4 1983009808
  %v596 = vunpack.c.0.s8 %v595
  %v597 = vlaneseq
  %v598 = vshrl.u32 %v597, 7
  %v599 = vsub.s32 %v596, %v598
  %v600 = vrot.slane %v309, %v599
  %v601 = vcombine.low %v592, %v600
  %v602 = vcombine.high %v592, %v600
  %v604 = vunpack.c.l.s4 1934713408
  %v605 = vunpack.c.0.s8 %v604
  %v606 = vlaneseq
  %v607 = vshrl.u32 %v606, 7
  %v608 = vsub.s32 %v605, %v607
  %v609 = vrot.slane %v601, %v608
  %v611 = vunpack.c.l.s4 1934713408
  %v612 = vunpack.c.0.s8 %v611
  %v613 = vlaneseq
  %v614 = vshrl.u32 %v613, 7
  %v615 = vsub.s32 %v612, %v614
  %v616 = vrot.slane %v602, %v615
  %v617 = vcombine.high %v609, 0
  %v618 = vcombine.high %v616, 0
  %v621 = vunpack.c.l.s4 1983009808
  %v622 = vunpack.c.0.s8 %v621
  %v623 = vlaneseq
  %v624 = vshrl.u32 %v623, 7
  %v625 = vsub.s32 %v622, %v624
  %v626 = vrot.slane %v306, %v625
  %v629 = vunpack.c.l.s4 1983009808
  %v630 = vunpack.c.0.s8 %v629
  %v631 = vlaneseq
  %v632 = vshrl.u32 %v631, 7
  %v633 = vsub.s32 %v630, %v632
  %v634 = vrot.slane %v312, %v633
  %v635 = vcombine.low %v626, %v634
  %v636 = vcombine.high %v626, %v634
  %v638 = vunpack.c.l.s4 1934713408
  %v639 = vunpack.c.0.s8 %v638
  %v640 = vlaneseq
  %v641 = vshrl.u32 %v640, 7
  %v642 = vsub.s32 %v639, %v641
  %v643 = vrot.slane %v635, %v642
  %v645 = vunpack.c.l.s4 1934713408
  %v646 = vunpack.c.0.s8 %v645
  %v647 = vlaneseq
  %v648 = vshrl.u32 %v647, 7
  %v649 = vsub.s32 %v646, %v648
  %v650 = vrot.slane %v636, %v649
  %v651 = vcombine.high %v643, 0
  %v652 = vcombine.high %v650, 0
  %v658 = vunpack.c.l.b16 %v337
  %v659 = vunpack.c.l.b16 %v405
  %v660 = vunpack.c.l.b16 %v473
  %v661 = vunpack.c.l.b16 %v541
  %v662 = vunpack.c.l.b16 %v609
  %v663 = vpack.c.b16 %v659, %v658
  %v664 = vpack.c.b16 %v661, %v660
  %v665 = vpack.c.b16 %v662, %v662
  %v671 = vunpack.c.l.b16 %v371
  %v672 = vunpack.c.l.b16 %v439
  %v673 = vunpack.c.l.b16 %v507
  %v674 = vunpack.c.l.b16 %v575
  %v675 = vunpack.c.l.b16 %v643
  %v676 = vpack.c.b16 %v672, %v671
  %v677 = vpack.c.b16 %v674, %v673
  %v678 = vpack.c.b16 %v675, %v675
  %679 = vrot.lane.b32.xlu0 %v676, 8
  %v680 = vpop.permute.xlu0 %679
  %681 = vrot.lane.b32.xlu0 %v677, 8
  %v682 = vpop.permute.xlu0 %681
  %683 = vrot.lane.b32.xlu0 %v678, 8
  %v684 = vpop.permute.xlu0 %683
  %v690 = vunpack.c.l.b16 %v345
  %v691 = vunpack.c.l.b16 %v413
  %v692 = vunpack.c.l.b16 %v481
  %v693 = vunpack.c.l.b16 %v549
  %v694 = vunpack.c.l.b16 %v617
  %v695 = vpack.c.b16 %v691, %v690
  %v696 = vpack.c.b16 %v693, %v692
  %v697 = vpack.c.b16 %v694, %v694
  %698 = vrot.lane.b32.xlu0 %v695, 16
  %v699 = vpop.permute.xlu0 %698
  %700 = vrot.lane.b32.xlu0 %v696, 16
  %v701 = vpop.permute.xlu0 %700
  %702 = vrot.lane.b32.xlu0 %v697, 16
  %v703 = vpop.permute.xlu0 %702
  %v709 = vunpack.c.l.b16 %v379
  %v710 = vunpack.c.l.b16 %v447
  %v711 = vunpack.c.l.b16 %v515
  %v712 = vunpack.c.l.b16 %v583
  %v713 = vunpack.c.l.b16 %v651
  %v714 = vpack.c.b16 %v710, %v709
  %v715 = vpack.c.b16 %v712, %v711
  %v716 = vpack.c.b16 %v713, %v713
  %717 = vrot.lane.b32.xlu0 %v714, 24
  %v718 = vpop.permute.xlu0 %717
  %719 = vrot.lane.b32.xlu0 %v715, 24
  %v720 = vpop.permute.xlu0 %719
  %721 = vrot.lane.b32.xlu0 %v716, 24
  %v722 = vpop.permute.xlu0 %721
  %v728 = vunpack.c.l.b16 %v344
  %v729 = vunpack.c.l.b16 %v412
  %v730 = vunpack.c.l.b16 %v480
  %v731 = vunpack.c.l.b16 %v548
  %v732 = vunpack.c.l.b16 %v616
  %v733 = vpack.c.b16 %v729, %v728
  %v734 = vpack.c.b16 %v731, %v730
  %v735 = vpack.c.b16 %v732, %v732
  %736 = vrot.lane.b32.xlu0 %v733, 32
  %v737 = vpop.permute.xlu0 %736
  %738 = vrot.lane.b32.xlu0 %v734, 32
  %v739 = vpop.permute.xlu0 %738
  %740 = vrot.lane.b32.xlu0 %v735, 32
  %v741 = vpop.permute.xlu0 %740
  %v747 = vunpack.c.l.b16 %v378
  %v748 = vunpack.c.l.b16 %v446
  %v749 = vunpack.c.l.b16 %v514
  %v750 = vunpack.c.l.b16 %v582
  %v751 = vunpack.c.l.b16 %v650
  %v752 = vpack.c.b16 %v748, %v747
  %v753 = vpack.c.b16 %v750, %v749
  %v754 = vpack.c.b16 %v751, %v751
  %755 = vrot.lane.b32.xlu0 %v752, 40
  %v756 = vpop.permute.xlu0 %755
  %757 = vrot.lane.b32.xlu0 %v753, 40
  %v758 = vpop.permute.xlu0 %757
  %759 = vrot.lane.b32.xlu0 %v754, 40
  %v760 = vpop.permute.xlu0 %759
  %v766 = vunpack.c.l.b16 %v346
  %v767 = vunpack.c.l.b16 %v414
  %v768 = vunpack.c.l.b16 %v482
  %v769 = vunpack.c.l.b16 %v550
  %v770 = vunpack.c.l.b16 %v618
  %v771 = vpack.c.b16 %v767, %v766
  %v772 = vpack.c.b16 %v769, %v768
  %v773 = vpack.c.b16 %v770, %v770
  %774 = vrot.lane.b32.xlu0 %v771, 48
  %v775 = vpop.permute.xlu0 %774
  %776 = vrot.lane.b32.xlu0 %v772, 48
  %v777 = vpop.permute.xlu0 %776
  %778 = vrot.lane.b32.xlu0 %v773, 48
  %v779 = vpop.permute.xlu0 %778
  %v785 = vunpack.c.l.b16 %v380
  %v786 = vunpack.c.l.b16 %v448
  %v787 = vunpack.c.l.b16 %v516
  %v788 = vunpack.c.l.b16 %v584
  %v789 = vunpack.c.l.b16 %v652
  %v790 = vpack.c.b16 %v786, %v785
  %v791 = vpack.c.b16 %v788, %v787
  %v792 = vpack.c.b16 %v789, %v789
  %793 = vrot.lane.b32.xlu0 %v790, 56
  %v794 = vpop.permute.xlu0 %793
  %795 = vrot.lane.b32.xlu0 %v791, 56
  %v796 = vpop.permute.xlu0 %795
  %797 = vrot.lane.b32.xlu0 %v792, 56
  %v798 = vpop.permute.xlu0 %797
  %vm799 = vcmask 64512
  %v802 = vsel %vm799, %v663, %v680
  %v805 = vsel %vm799, %v664, %v682
  %v808 = vsel %vm799, %v665, %v684
  %vm809 = vcmask 130048
  %v811 = vsel %vm809, %v802, %v699
  %v813 = vsel %vm809, %v805, %v701
  %v815 = vsel %vm809, %v808, %v703
  %vm816 = vcmask 195584
  %v818 = vsel %vm816, %v811, %v718
  %v820 = vsel %vm816, %v813, %v720
  %v822 = vsel %vm816, %v815, %v722
  %vm823 = vcmask 261120
  %v825 = vsel %vm823, %v818, %v737
  %v827 = vsel %vm823, %v820, %v739
  %v829 = vsel %vm823, %v822, %v741
  %vm830 = vcmask 326656
  %v832 = vsel %vm830, %v825, %v756
  %v834 = vsel %vm830, %v827, %v758
  %v836 = vsel %vm830, %v829, %v760
  %vm837 = vcmask 392192
  %v839 = vsel %vm837, %v832, %v775
  %v841 = vsel %vm837, %v834, %v777
  %v843 = vsel %vm837, %v836, %v779
  %vm844 = vcmask 457728
  %v846 = vsel %vm844, %v839, %v794
  %v848 = vsel %vm844, %v841, %v796
  %v850 = vsel %vm844, %v843, %v798
  %s851 = scalar_lea.vmem %s0, 128
  %v852 = vld [vmem:[%s851] sm:$0xf]
  %v853 = vld [vmem:[%s851 + $0x8] sm:$0xf]
  %v854 = vld [vmem:[%s851 + $0x10] sm:$0xf]
  %v855 = vld [vmem:[%s851 + $0x18] sm:$0xf]
  %s856 = scalar_lea.vmem %s0, 160
  %v857 = vld [vmem:[%s856] sm:$0xf]
  %v858 = vld [vmem:[%s856 + $0x8] sm:$0xf]
  %v859 = vld [vmem:[%s856 + $0x10] sm:$0xf]
  %v860 = vld [vmem:[%s856 + $0x18] sm:$0xf]
  %s861 = scalar_lea.vmem %s0, 192
  %v862 = vld [vmem:[%s861] sm:$0xf]
  %v863 = vld [vmem:[%s861 + $0x8] sm:$0xf]
  %v864 = vld [vmem:[%s861 + $0x10] sm:$0xf]
  %v865 = vld [vmem:[%s861 + $0x18] sm:$0xf]
  %s866 = scalar_lea.vmem %s0, 224
  %v867 = vld [vmem:[%s866] sm:$0xf]
  %v868 = vld [vmem:[%s866 + $0x8] sm:$0xf]
  %v869 = vld [vmem:[%s866 + $0x10] sm:$0xf]
  %v870 = vld [vmem:[%s866 + $0x18] sm:$0xf]
  %v871 = vld [vmem:[%s851 + $0x4] sm:$0x1]
  %v872 = vld [vmem:[%s851 + $0xc] sm:$0x1]
  %v873 = vld [vmem:[%s851 + $0x14] sm:$0x1]
  %v874 = vld [vmem:[%s851 + $0x1c] sm:$0x1]
  %v875 = vld [vmem:[%s856 + $0x4] sm:$0x1]
  %v876 = vld [vmem:[%s856 + $0xc] sm:$0x1]
  %v877 = vld [vmem:[%s856 + $0x14] sm:$0x1]
  %v878 = vld [vmem:[%s856 + $0x1c] sm:$0x1]
  %883 = vrot.lane.b32.xlu0 %v852, 127
  %v884 = vpop.permute.xlu0 %883
  %885 = vrot.lane.b32.xlu0 %v853, 127
  %v886 = vpop.permute.xlu0 %885
  %887 = vrot.lane.b32.xlu0 %v854, 127
  %v888 = vpop.permute.xlu0 %887
  %889 = vrot.lane.b32.xlu0 %v855, 127
  %v890 = vpop.permute.xlu0 %889
  %895 = vrot.lane.b32.xlu0 %v862, 127
  %v896 = vpop.permute.xlu0 %895
  %897 = vrot.lane.b32.xlu0 %v863, 127
  %v898 = vpop.permute.xlu0 %897
  %899 = vrot.lane.b32.xlu0 %v864, 127
  %v900 = vpop.permute.xlu0 %899
  %901 = vrot.lane.b32.xlu0 %v865, 127
  %v902 = vpop.permute.xlu0 %901
  %v904 = vshrl.u32 %v852, 16
  %v906 = vrot.slane %v904, 4
  %v907 = vshll.u32 %v852, 16
  %v909 = vrot.slane %v907, 5
  %v910 = vor.u32 %v906, %v909
  %v911 = vrot.slane %v910, 4
  %v913 = vshll.u32 %v871, 16
  %v915 = vrot.slane %v913, 5
  %v916 = vsel %vm68, %v911, %v915
  %v918 = vshrl.u32 %v853, 16
  %v920 = vrot.slane %v918, 4
  %v921 = vshll.u32 %v853, 16
  %v923 = vrot.slane %v921, 5
  %v924 = vor.u32 %v920, %v923
  %v925 = vrot.slane %v924, 4
  %v927 = vshll.u32 %v872, 16
  %v929 = vrot.slane %v927, 5
  %v930 = vsel %vm68, %v925, %v929
  %v932 = vshrl.u32 %v854, 16
  %v934 = vrot.slane %v932, 4
  %v935 = vshll.u32 %v854, 16
  %v937 = vrot.slane %v935, 5
  %v938 = vor.u32 %v934, %v937
  %v939 = vrot.slane %v938, 4
  %v941 = vshll.u32 %v873, 16
  %v943 = vrot.slane %v941, 5
  %v944 = vsel %vm68, %v939, %v943
  %v946 = vshrl.u32 %v855, 16
  %v948 = vrot.slane %v946, 4
  %v949 = vshll.u32 %v855, 16
  %v951 = vrot.slane %v949, 5
  %v952 = vor.u32 %v948, %v951
  %v953 = vrot.slane %v952, 4
  %v955 = vshll.u32 %v874, 16
  %v957 = vrot.slane %v955, 5
  %v958 = vsel %vm68, %v953, %v957
  %v960 = vshrl.u32 %v857, 16
  %v962 = vrot.slane %v960, 4
  %v963 = vshll.u32 %v857, 16
  %v965 = vrot.slane %v963, 5
  %v966 = vor.u32 %v962, %v965
  %v967 = vrot.slane %v966, 4
  %v969 = vshll.u32 %v875, 16
  %v971 = vrot.slane %v969, 5
  %v972 = vsel %vm68, %v967, %v971
  %v974 = vshrl.u32 %v858, 16
  %v976 = vrot.slane %v974, 4
  %v977 = vshll.u32 %v858, 16
  %v979 = vrot.slane %v977, 5
  %v980 = vor.u32 %v976, %v979
  %v981 = vrot.slane %v980, 4
  %v983 = vshll.u32 %v876, 16
  %v985 = vrot.slane %v983, 5
  %v986 = vsel %vm68, %v981, %v985
  %v988 = vshrl.u32 %v859, 16
  %v990 = vrot.slane %v988, 4
  %v991 = vshll.u32 %v859, 16
  %v993 = vrot.slane %v991, 5
  %v994 = vor.u32 %v990, %v993
  %v995 = vrot.slane %v994, 4
  %v997 = vshll.u32 %v877, 16
  %v999 = vrot.slane %v997, 5
  %v1000 = vsel %vm68, %v995, %v999
  %v1002 = vshrl.u32 %v860, 16
  %v1004 = vrot.slane %v1002, 4
  %v1005 = vshll.u32 %v860, 16
  %v1007 = vrot.slane %v1005, 5
  %v1008 = vor.u32 %v1004, %v1007
  %v1009 = vrot.slane %v1008, 4
  %v1011 = vshll.u32 %v878, 16
  %v1013 = vrot.slane %v1011, 5
  %v1014 = vsel %vm68, %v1009, %v1013
  %1015 = vrot.lane.b32.xlu0 %v916, 127
  %v1016 = vpop.permute.xlu0 %1015
  %1017 = vrot.lane.b32.xlu0 %v930, 127
  %v1018 = vpop.permute.xlu0 %1017
  %1019 = vrot.lane.b32.xlu0 %v944, 127
  %v1020 = vpop.permute.xlu0 %1019
  %1021 = vrot.lane.b32.xlu0 %v958, 127
  %v1022 = vpop.permute.xlu0 %1021
  %v1023 = vpack.i.b16 %v853, %v852
  %v1025 = vpack.i.b16 %v918, %v904
  %v1027 = vpack.i.b16 %v855, %v854
  %v1029 = vpack.i.b16 %v946, %v932
  %v1031 = vpack.i.b16 %v858, %v857
  %v1033 = vpack.i.b16 %v974, %v960
  %v1035 = vpack.i.b16 %v860, %v859
  %v1037 = vpack.i.b16 %v1002, %v988
  %v1041 = vpack.i.b16 %v886, %v884
  %v1043 = vshrl.u32 %v884, 16
  %v1044 = vshrl.u32 %v886, 16
  %v1045 = vpack.i.b16 %v1044, %v1043
  %v1049 = vpack.i.b16 %v890, %v888
  %v1051 = vshrl.u32 %v888, 16
  %v1052 = vshrl.u32 %v890, 16
  %v1053 = vpack.i.b16 %v1052, %v1051
  %v1057 = vpack.i.b16 %v863, %v862
  %v1059 = vshrl.u32 %v862, 16
  %v1060 = vshrl.u32 %v863, 16
  %v1061 = vpack.i.b16 %v1060, %v1059
  %v1065 = vpack.i.b16 %v865, %v864
  %v1067 = vshrl.u32 %v864, 16
  %v1068 = vshrl.u32 %v865, 16
  %v1069 = vpack.i.b16 %v1068, %v1067
  %v1073 = vpack.i.b16 %v868, %v867
  %v1075 = vshrl.u32 %v867, 16
  %v1076 = vshrl.u32 %v868, 16
  %v1077 = vpack.i.b16 %v1076, %v1075
  %v1081 = vpack.i.b16 %v870, %v869
  %v1083 = vshrl.u32 %v869, 16
  %v1084 = vshrl.u32 %v870, 16
  %v1085 = vpack.i.b16 %v1084, %v1083
  %v1089 = vpack.i.b16 %v898, %v896
  %v1091 = vshrl.u32 %v896, 16
  %v1092 = vshrl.u32 %v898, 16
  %v1093 = vpack.i.b16 %v1092, %v1091
  %v1097 = vpack.i.b16 %v902, %v900
  %v1099 = vshrl.u32 %v900, 16
  %v1100 = vshrl.u32 %v902, 16
  %v1101 = vpack.i.b16 %v1100, %v1099
  %v1105 = vpack.i.b16 %v930, %v916
  %v1107 = vshrl.u32 %v916, 16
  %v1108 = vshrl.u32 %v930, 16
  %v1109 = vpack.i.b16 %v1108, %v1107
  %v1113 = vpack.i.b16 %v958, %v944
  %v1115 = vshrl.u32 %v944, 16
  %v1116 = vshrl.u32 %v958, 16
  %v1117 = vpack.i.b16 %v1116, %v1115
  %v1121 = vpack.i.b16 %v986, %v972
  %v1123 = vshrl.u32 %v972, 16
  %v1124 = vshrl.u32 %v986, 16
  %v1125 = vpack.i.b16 %v1124, %v1123
  %v1129 = vpack.i.b16 %v1014, %v1000
  %v1131 = vshrl.u32 %v1000, 16
  %v1132 = vshrl.u32 %v1014, 16
  %v1133 = vpack.i.b16 %v1132, %v1131
  %v1137 = vpack.i.b16 %v1018, %v1016
  %v1138 = vshrl.u32 %v1016, 16
  %v1139 = vshrl.u32 %v1018, 16
  %v1140 = vpack.i.b16 %v1139, %v1138
  %v1143 = vpack.i.b16 %v1022, %v1020
  %v1144 = vshrl.u32 %v1020, 16
  %v1145 = vshrl.u32 %v1022, 16
  %v1146 = vpack.i.b16 %v1145, %v1144
  %v1147 = vcombine.low %v1023, %v1031
  %v1149 = vunpack.c.l.s4 1983009808
  %v1150 = vunpack.c.0.s8 %v1149
  %v1151 = vlaneseq
  %v1152 = vshrl.u32 %v1151, 7
  %v1153 = vsub.s32 %v1150, %v1152
  %v1154 = vrot.slane %v1147, %v1153
  %v1155 = vcombine.low %v1027, %v1035
  %v1157 = vunpack.c.l.s4 1983009808
  %v1158 = vunpack.c.0.s8 %v1157
  %v1159 = vlaneseq
  %v1160 = vshrl.u32 %v1159, 7
  %v1161 = vsub.s32 %v1158, %v1160
  %v1162 = vrot.slane %v1155, %v1161
  %v1163 = vcombine.low %v1154, %v1162
  %v1164 = vcombine.high %v1154, %v1162
  %v1166 = vunpack.c.l.s4 1934713408
  %v1167 = vunpack.c.0.s8 %v1166
  %v1168 = vlaneseq
  %v1169 = vshrl.u32 %v1168, 7
  %v1170 = vsub.s32 %v1167, %v1169
  %v1171 = vrot.slane %v1163, %v1170
  %v1173 = vunpack.c.l.s4 1934713408
  %v1174 = vunpack.c.0.s8 %v1173
  %v1175 = vlaneseq
  %v1176 = vshrl.u32 %v1175, 7
  %v1177 = vsub.s32 %v1174, %v1176
  %v1178 = vrot.slane %v1164, %v1177
  %v1179 = vcombine.high %v1171, 0
  %v1180 = vcombine.high %v1178, 0
  %v1181 = vcombine.low %v1025, %v1033
  %v1183 = vunpack.c.l.s4 1983009808
  %v1184 = vunpack.c.0.s8 %v1183
  %v1185 = vlaneseq
  %v1186 = vshrl.u32 %v1185, 7
  %v1187 = vsub.s32 %v1184, %v1186
  %v1188 = vrot.slane %v1181, %v1187
  %v1189 = vcombine.low %v1029, %v1037
  %v1191 = vunpack.c.l.s4 1983009808
  %v1192 = vunpack.c.0.s8 %v1191
  %v1193 = vlaneseq
  %v1194 = vshrl.u32 %v1193, 7
  %v1195 = vsub.s32 %v1192, %v1194
  %v1196 = vrot.slane %v1189, %v1195
  %v1197 = vcombine.low %v1188, %v1196
  %v1198 = vcombine.high %v1188, %v1196
  %v1200 = vunpack.c.l.s4 1934713408
  %v1201 = vunpack.c.0.s8 %v1200
  %v1202 = vlaneseq
  %v1203 = vshrl.u32 %v1202, 7
  %v1204 = vsub.s32 %v1201, %v1203
  %v1205 = vrot.slane %v1197, %v1204
  %v1207 = vunpack.c.l.s4 1934713408
  %v1208 = vunpack.c.0.s8 %v1207
  %v1209 = vlaneseq
  %v1210 = vshrl.u32 %v1209, 7
  %v1211 = vsub.s32 %v1208, %v1210
  %v1212 = vrot.slane %v1198, %v1211
  %v1213 = vcombine.high %v1205, 0
  %v1214 = vcombine.high %v1212, 0
  %v1215 = vcombine.low %v1041, %v1057
  %v1217 = vunpack.c.l.s4 1983009808
  %v1218 = vunpack.c.0.s8 %v1217
  %v1219 = vlaneseq
  %v1220 = vshrl.u32 %v1219, 7
  %v1221 = vsub.s32 %v1218, %v1220
  %v1222 = vrot.slane %v1215, %v1221
  %v1223 = vcombine.low %v1049, %v1065
  %v1225 = vunpack.c.l.s4 1983009808
  %v1226 = vunpack.c.0.s8 %v1225
  %v1227 = vlaneseq
  %v1228 = vshrl.u32 %v1227, 7
  %v1229 = vsub.s32 %v1226, %v1228
  %v1230 = vrot.slane %v1223, %v1229
  %v1231 = vcombine.low %v1222, %v1230
  %v1232 = vcombine.high %v1222, %v1230
  %v1234 = vunpack.c.l.s4 1934713408
  %v1235 = vunpack.c.0.s8 %v1234
  %v1236 = vlaneseq
  %v1237 = vshrl.u32 %v1236, 7
  %v1238 = vsub.s32 %v1235, %v1237
  %v1239 = vrot.slane %v1231, %v1238
  %v1241 = vunpack.c.l.s4 1934713408
  %v1242 = vunpack.c.0.s8 %v1241
  %v1243 = vlaneseq
  %v1244 = vshrl.u32 %v1243, 7
  %v1245 = vsub.s32 %v1242, %v1244
  %v1246 = vrot.slane %v1232, %v1245
  %v1247 = vcombine.high %v1239, 0
  %v1248 = vcombine.high %v1246, 0
  %v1249 = vcombine.low %v1045, %v1061
  %v1251 = vunpack.c.l.s4 1983009808
  %v1252 = vunpack.c.0.s8 %v1251
  %v1253 = vlaneseq
  %v1254 = vshrl.u32 %v1253, 7
  %v1255 = vsub.s32 %v1252, %v1254
  %v1256 = vrot.slane %v1249, %v1255
  %v1257 = vcombine.low %v1053, %v1069
  %v1259 = vunpack.c.l.s4 1983009808
  %v1260 = vunpack.c.0.s8 %v1259
  %v1261 = vlaneseq
  %v1262 = vshrl.u32 %v1261, 7
  %v1263 = vsub.s32 %v1260, %v1262
  %v1264 = vrot.slane %v1257, %v1263
  %v1265 = vcombine.low %v1256, %v1264
  %v1266 = vcombine.high %v1256, %v1264
  %v1268 = vunpack.c.l.s4 1934713408
  %v1269 = vunpack.c.0.s8 %v1268
  %v1270 = vlaneseq
  %v1271 = vshrl.u32 %v1270, 7
  %v1272 = vsub.s32 %v1269, %v1271
  %v1273 = vrot.slane %v1265, %v1272
  %v1275 = vunpack.c.l.s4 1934713408
  %v1276 = vunpack.c.0.s8 %v1275
  %v1277 = vlaneseq
  %v1278 = vshrl.u32 %v1277, 7
  %v1279 = vsub.s32 %v1276, %v1278
  %v1280 = vrot.slane %v1266, %v1279
  %v1281 = vcombine.high %v1273, 0
  %v1282 = vcombine.high %v1280, 0
  %v1283 = vcombine.low %v1073, %v1089
  %v1285 = vunpack.c.l.s4 1983009808
  %v1286 = vunpack.c.0.s8 %v1285
  %v1287 = vlaneseq
  %v1288 = vshrl.u32 %v1287, 7
  %v1289 = vsub.s32 %v1286, %v1288
  %v1290 = vrot.slane %v1283, %v1289
  %v1291 = vcombine.low %v1081, %v1097
  %v1293 = vunpack.c.l.s4 1983009808
  %v1294 = vunpack.c.0.s8 %v1293
  %v1295 = vlaneseq
  %v1296 = vshrl.u32 %v1295, 7
  %v1297 = vsub.s32 %v1294, %v1296
  %v1298 = vrot.slane %v1291, %v1297
  %v1299 = vcombine.low %v1290, %v1298
  %v1300 = vcombine.high %v1290, %v1298
  %v1302 = vunpack.c.l.s4 1934713408
  %v1303 = vunpack.c.0.s8 %v1302
  %v1304 = vlaneseq
  %v1305 = vshrl.u32 %v1304, 7
  %v1306 = vsub.s32 %v1303, %v1305
  %v1307 = vrot.slane %v1299, %v1306
  %v1309 = vunpack.c.l.s4 1934713408
  %v1310 = vunpack.c.0.s8 %v1309
  %v1311 = vlaneseq
  %v1312 = vshrl.u32 %v1311, 7
  %v1313 = vsub.s32 %v1310, %v1312
  %v1314 = vrot.slane %v1300, %v1313
  %v1315 = vcombine.high %v1307, 0
  %v1316 = vcombine.high %v1314, 0
  %v1317 = vcombine.low %v1077, %v1093
  %v1319 = vunpack.c.l.s4 1983009808
  %v1320 = vunpack.c.0.s8 %v1319
  %v1321 = vlaneseq
  %v1322 = vshrl.u32 %v1321, 7
  %v1323 = vsub.s32 %v1320, %v1322
  %v1324 = vrot.slane %v1317, %v1323
  %v1325 = vcombine.low %v1085, %v1101
  %v1327 = vunpack.c.l.s4 1983009808
  %v1328 = vunpack.c.0.s8 %v1327
  %v1329 = vlaneseq
  %v1330 = vshrl.u32 %v1329, 7
  %v1331 = vsub.s32 %v1328, %v1330
  %v1332 = vrot.slane %v1325, %v1331
  %v1333 = vcombine.low %v1324, %v1332
  %v1334 = vcombine.high %v1324, %v1332
  %v1336 = vunpack.c.l.s4 1934713408
  %v1337 = vunpack.c.0.s8 %v1336
  %v1338 = vlaneseq
  %v1339 = vshrl.u32 %v1338, 7
  %v1340 = vsub.s32 %v1337, %v1339
  %v1341 = vrot.slane %v1333, %v1340
  %v1343 = vunpack.c.l.s4 1934713408
  %v1344 = vunpack.c.0.s8 %v1343
  %v1345 = vlaneseq
  %v1346 = vshrl.u32 %v1345, 7
  %v1347 = vsub.s32 %v1344, %v1346
  %v1348 = vrot.slane %v1334, %v1347
  %v1349 = vcombine.high %v1341, 0
  %v1350 = vcombine.high %v1348, 0
  %v1351 = vcombine.low %v1105, %v1121
  %v1353 = vunpack.c.l.s4 1983009808
  %v1354 = vunpack.c.0.s8 %v1353
  %v1355 = vlaneseq
  %v1356 = vshrl.u32 %v1355, 7
  %v1357 = vsub.s32 %v1354, %v1356
  %v1358 = vrot.slane %v1351, %v1357
  %v1359 = vcombine.low %v1113, %v1129
  %v1361 = vunpack.c.l.s4 1983009808
  %v1362 = vunpack.c.0.s8 %v1361
  %v1363 = vlaneseq
  %v1364 = vshrl.u32 %v1363, 7
  %v1365 = vsub.s32 %v1362, %v1364
  %v1366 = vrot.slane %v1359, %v1365
  %v1367 = vcombine.low %v1358, %v1366
  %v1368 = vcombine.high %v1358, %v1366
  %v1370 = vunpack.c.l.s4 1934713408
  %v1371 = vunpack.c.0.s8 %v1370
  %v1372 = vlaneseq
  %v1373 = vshrl.u32 %v1372, 7
  %v1374 = vsub.s32 %v1371, %v1373
  %v1375 = vrot.slane %v1367, %v1374
  %v1377 = vunpack.c.l.s4 1934713408
  %v1378 = vunpack.c.0.s8 %v1377
  %v1379 = vlaneseq
  %v1380 = vshrl.u32 %v1379, 7
  %v1381 = vsub.s32 %v1378, %v1380
  %v1382 = vrot.slane %v1368, %v1381
  %v1383 = vcombine.high %v1375, 0
  %v1384 = vcombine.high %v1382, 0
  %v1385 = vcombine.low %v1109, %v1125
  %v1387 = vunpack.c.l.s4 1983009808
  %v1388 = vunpack.c.0.s8 %v1387
  %v1389 = vlaneseq
  %v1390 = vshrl.u32 %v1389, 7
  %v1391 = vsub.s32 %v1388, %v1390
  %v1392 = vrot.slane %v1385, %v1391
  %v1393 = vcombine.low %v1117, %v1133
  %v1395 = vunpack.c.l.s4 1983009808
  %v1396 = vunpack.c.0.s8 %v1395
  %v1397 = vlaneseq
  %v1398 = vshrl.u32 %v1397, 7
  %v1399 = vsub.s32 %v1396, %v1398
  %v1400 = vrot.slane %v1393, %v1399
  %v1401 = vcombine.low %v1392, %v1400
  %v1402 = vcombine.high %v1392, %v1400
  %v1404 = vunpack.c.l.s4 1934713408
  %v1405 = vunpack.c.0.s8 %v1404
  %v1406 = vlaneseq
  %v1407 = vshrl.u32 %v1406, 7
  %v1408 = vsub.s32 %v1405, %v1407
  %v1409 = vrot.slane %v1401, %v1408
  %v1411 = vunpack.c.l.s4 1934713408
  %v1412 = vunpack.c.0.s8 %v1411
  %v1413 = vlaneseq
  %v1414 = vshrl.u32 %v1413, 7
  %v1415 = vsub.s32 %v1412, %v1414
  %v1416 = vrot.slane %v1402, %v1415
  %v1417 = vcombine.high %v1409, 0
  %v1418 = vcombine.high %v1416, 0
  %v1421 = vunpack.c.l.s4 1983009808
  %v1422 = vunpack.c.0.s8 %v1421
  %v1423 = vlaneseq
  %v1424 = vshrl.u32 %v1423, 7
  %v1425 = vsub.s32 %v1422, %v1424
  %v1426 = vrot.slane %v1137, %v1425
  %v1429 = vunpack.c.l.s4 1983009808
  %v1430 = vunpack.c.0.s8 %v1429
  %v1431 = vlaneseq
  %v1432 = vshrl.u32 %v1431, 7
  %v1433 = vsub.s32 %v1430, %v1432
  %v1434 = vrot.slane %v1143, %v1433
  %v1435 = vcombine.low %v1426, %v1434
  %v1436 = vcombine.high %v1426, %v1434
  %v1438 = vunpack.c.l.s4 1934713408
  %v1439 = vunpack.c.0.s8 %v1438
  %v1440 = vlaneseq
  %v1441 = vshrl.u32 %v1440, 7
  %v1442 = vsub.s32 %v1439, %v1441
  %v1443 = vrot.slane %v1435, %v1442
  %v1445 = vunpack.c.l.s4 1934713408
  %v1446 = vunpack.c.0.s8 %v1445
  %v1447 = vlaneseq
  %v1448 = vshrl.u32 %v1447, 7
  %v1449 = vsub.s32 %v1446, %v1448
  %v1450 = vrot.slane %v1436, %v1449
  %v1451 = vcombine.high %v1443, 0
  %v1452 = vcombine.high %v1450, 0
  %v1455 = vunpack.c.l.s4 1983009808
  %v1456 = vunpack.c.0.s8 %v1455
  %v1457 = vlaneseq
  %v1458 = vshrl.u32 %v1457, 7
  %v1459 = vsub.s32 %v1456, %v1458
  %v1460 = vrot.slane %v1140, %v1459
  %v1463 = vunpack.c.l.s4 1983009808
  %v1464 = vunpack.c.0.s8 %v1463
  %v1465 = vlaneseq
  %v1466 = vshrl.u32 %v1465, 7
  %v1467 = vsub.s32 %v1464, %v1466
  %v1468 = vrot.slane %v1146, %v1467
  %v1469 = vcombine.low %v1460, %v1468
  %v1470 = vcombine.high %v1460, %v1468
  %v1472 = vunpack.c.l.s4 1934713408
  %v1473 = vunpack.c.0.s8 %v1472
  %v1474 = vlaneseq
  %v1475 = vshrl.u32 %v1474, 7
  %v1476 = vsub.s32 %v1473, %v1475
  %v1477 = vrot.slane %v1469, %v1476
  %v1479 = vunpack.c.l.s4 1934713408
  %v1480 = vunpack.c.0.s8 %v1479
  %v1481 = vlaneseq
  %v1482 = vshrl.u32 %v1481, 7
  %v1483 = vsub.s32 %v1480, %v1482
  %v1484 = vrot.slane %v1470, %v1483
  %v1485 = vcombine.high %v1477, 0
  %v1486 = vcombine.high %v1484, 0
  %v1492 = vunpack.c.l.b16 %v1171
  %v1493 = vunpack.c.l.b16 %v1239
  %v1494 = vunpack.c.l.b16 %v1307
  %v1495 = vunpack.c.l.b16 %v1375
  %v1496 = vunpack.c.l.b16 %v1443
  %v1497 = vpack.c.b16 %v1493, %v1492
  %v1498 = vpack.c.b16 %v1495, %v1494
  %v1499 = vpack.c.b16 %v1496, %v1496
  %v1505 = vunpack.c.l.b16 %v1205
  %v1506 = vunpack.c.l.b16 %v1273
  %v1507 = vunpack.c.l.b16 %v1341
  %v1508 = vunpack.c.l.b16 %v1409
  %v1509 = vunpack.c.l.b16 %v1477
  %v1510 = vpack.c.b16 %v1506, %v1505
  %v1511 = vpack.c.b16 %v1508, %v1507
  %v1512 = vpack.c.b16 %v1509, %v1509
  %1513 = vrot.lane.b32.xlu0 %v1510, 8
  %v1514 = vpop.permute.xlu0 %1513
  %1515 = vrot.lane.b32.xlu0 %v1511, 8
  %v1516 = vpop.permute.xlu0 %1515
  %1517 = vrot.lane.b32.xlu0 %v1512, 8
  %v1518 = vpop.permute.xlu0 %1517
  %v1524 = vunpack.c.l.b16 %v1179
  %v1525 = vunpack.c.l.b16 %v1247
  %v1526 = vunpack.c.l.b16 %v1315
  %v1527 = vunpack.c.l.b16 %v1383
  %v1528 = vunpack.c.l.b16 %v1451
  %v1529 = vpack.c.b16 %v1525, %v1524
  %v1530 = vpack.c.b16 %v1527, %v1526
  %v1531 = vpack.c.b16 %v1528, %v1528
  %1532 = vrot.lane.b32.xlu0 %v1529, 16
  %v1533 = vpop.permute.xlu0 %1532
  %1534 = vrot.lane.b32.xlu0 %v1530, 16
  %v1535 = vpop.permute.xlu0 %1534
  %1536 = vrot.lane.b32.xlu0 %v1531, 16
  %v1537 = vpop.permute.xlu0 %1536
  %v1543 = vunpack.c.l.b16 %v1213
  %v1544 = vunpack.c.l.b16 %v1281
  %v1545 = vunpack.c.l.b16 %v1349
  %v1546 = vunpack.c.l.b16 %v1417
  %v1547 = vunpack.c.l.b16 %v1485
  %v1548 = vpack.c.b16 %v1544, %v1543
  %v1549 = vpack.c.b16 %v1546, %v1545
  %v1550 = vpack.c.b16 %v1547, %v1547
  %1551 = vrot.lane.b32.xlu0 %v1548, 24
  %v1552 = vpop.permute.xlu0 %1551
  %1553 = vrot.lane.b32.xlu0 %v1549, 24
  %v1554 = vpop.permute.xlu0 %1553
  %1555 = vrot.lane.b32.xlu0 %v1550, 24
  %v1556 = vpop.permute.xlu0 %1555
  %v1562 = vunpack.c.l.b16 %v1178
  %v1563 = vunpack.c.l.b16 %v1246
  %v1564 = vunpack.c.l.b16 %v1314
  %v1565 = vunpack.c.l.b16 %v1382
  %v1566 = vunpack.c.l.b16 %v1450
  %v1567 = vpack.c.b16 %v1563, %v1562
  %v1568 = vpack.c.b16 %v1565, %v1564
  %v1569 = vpack.c.b16 %v1566, %v1566
  %1570 = vrot.lane.b32.xlu0 %v1567, 32
  %v1571 = vpop.permute.xlu0 %1570
  %1572 = vrot.lane.b32.xlu0 %v1568, 32
  %v1573 = vpop.permute.xlu0 %1572
  %1574 = vrot.lane.b32.xlu0 %v1569, 32
  %v1575 = vpop.permute.xlu0 %1574
  %v1581 = vunpack.c.l.b16 %v1212
  %v1582 = vunpack.c.l.b16 %v1280
  %v1583 = vunpack.c.l.b16 %v1348
  %v1584 = vunpack.c.l.b16 %v1416
  %v1585 = vunpack.c.l.b16 %v1484
  %v1586 = vpack.c.b16 %v1582, %v1581
  %v1587 = vpack.c.b16 %v1584, %v1583
  %v1588 = vpack.c.b16 %v1585, %v1585
  %1589 = vrot.lane.b32.xlu0 %v1586, 40
  %v1590 = vpop.permute.xlu0 %1589
  %1591 = vrot.lane.b32.xlu0 %v1587, 40
  %v1592 = vpop.permute.xlu0 %1591
  %1593 = vrot.lane.b32.xlu0 %v1588, 40
  %v1594 = vpop.permute.xlu0 %1593
  %v1600 = vunpack.c.l.b16 %v1180
  %v1601 = vunpack.c.l.b16 %v1248
  %v1602 = vunpack.c.l.b16 %v1316
  %v1603 = vunpack.c.l.b16 %v1384
  %v1604 = vunpack.c.l.b16 %v1452
  %v1605 = vpack.c.b16 %v1601, %v1600
  %v1606 = vpack.c.b16 %v1603, %v1602
  %v1607 = vpack.c.b16 %v1604, %v1604
  %1608 = vrot.lane.b32.xlu0 %v1605, 48
  %v1609 = vpop.permute.xlu0 %1608
  %1610 = vrot.lane.b32.xlu0 %v1606, 48
  %v1611 = vpop.permute.xlu0 %1610
  %1612 = vrot.lane.b32.xlu0 %v1607, 48
  %v1613 = vpop.permute.xlu0 %1612
  %v1619 = vunpack.c.l.b16 %v1214
  %v1620 = vunpack.c.l.b16 %v1282
  %v1621 = vunpack.c.l.b16 %v1350
  %v1622 = vunpack.c.l.b16 %v1418
  %v1623 = vunpack.c.l.b16 %v1486
  %v1624 = vpack.c.b16 %v1620, %v1619
  %v1625 = vpack.c.b16 %v1622, %v1621
  %v1626 = vpack.c.b16 %v1623, %v1623
  %1627 = vrot.lane.b32.xlu0 %v1624, 56
  %v1628 = vpop.permute.xlu0 %1627
  %1629 = vrot.lane.b32.xlu0 %v1625, 56
  %v1630 = vpop.permute.xlu0 %1629
  %1631 = vrot.lane.b32.xlu0 %v1626, 56
  %v1632 = vpop.permute.xlu0 %1631
  %v1635 = vsel %vm799, %v1497, %v1514
  %v1638 = vsel %vm799, %v1498, %v1516
  %v1641 = vsel %vm799, %v1499, %v1518
  %v1643 = vsel %vm809, %v1635, %v1533
  %v1645 = vsel %vm809, %v1638, %v1535
  %v1647 = vsel %vm809, %v1641, %v1537
  %v1649 = vsel %vm816, %v1643, %v1552
  %v1651 = vsel %vm816, %v1645, %v1554
  %v1653 = vsel %vm816, %v1647, %v1556
  %v1655 = vsel %vm823, %v1649, %v1571
  %v1657 = vsel %vm823, %v1651, %v1573
  %v1659 = vsel %vm823, %v1653, %v1575
  %v1661 = vsel %vm830, %v1655, %v1590
  %v1663 = vsel %vm830, %v1657, %v1592
  %v1665 = vsel %vm830, %v1659, %v1594
  %v1667 = vsel %vm837, %v1661, %v1609
  %v1669 = vsel %vm837, %v1663, %v1611
  %v1671 = vsel %vm837, %v1665, %v1613
  %v1673 = vsel %vm844, %v1667, %v1628
  %v1675 = vsel %vm844, %v1669, %v1630
  %v1677 = vsel %vm844, %v1671, %v1632
  %1681 = vrot.lane.b32.xlu0 %v1673, 64
  %v1682 = vpop.permute.xlu0 %1681
  %1683 = vrot.lane.b32.xlu0 %v1675, 64
  %v1684 = vpop.permute.xlu0 %1683
  %1685 = vrot.lane.b32.xlu0 %v1677, 64
  %v1686 = vpop.permute.xlu0 %1685
  %vm1687 = vcmask 523264
  %v1689 = vsel %vm1687, %v846, %v1682
  %v1692 = vsel %vm1687, %v848, %v1684
  %v1695 = vsel %vm1687, %v850, %v1686
  %v1696 = vld [vmem:[%s1] sm:$0xf]
  %v1697 = vld [vmem:[%s1 + $0x4] sm:$0xf]
  %v1698 = vld [vmem:[%s2] sm:$0xff]
  %v1699 = vld [vmem:[%s2 + $0x8] sm:$0xff]
  %1701 = vset.pattern.permute.xlu0 0
  %1702 = vperm.xlu0 %1701, %v1698
  %v1703 = vpop.permute.xlu0 %1702
  %1706 = vset.pattern.permute.xlu0 0
  %1707 = vperm.xlu0 %1706, %v1699
  %v1708 = vpop.permute.xlu0 %1707
  %v1712 = vunpack.c.l.b16 %v1696
  %v1713 = vunpack.c.l.b16 %v1697
  %v1714 = vpack.c.b16 %v1713, %v1712
  %vm1715 = vcmask 293888
  %v1717 = vsel %vm1715, %v1714, 0
  %vm1719 = vcmask 1041408
  %v1720 = vsel %vm1719, %v1695, 0
  %1722 = vmatprep.subr.bf16.mxu0 0
  %1723 = vmatpush1.bf16.msra.mxu0 0
  %1724 = vmatprep.subr.bf16.mxu0 0
  %1725 = vmatpush1.bf16.msra.mxu0 0
  %1726 = vmatprep.subr.bf16.mxu0 0
  %1727 = vmatpush1.bf16.msra.mxu0 0
  %1728 = vmatprep.subr.bf16.mxu0 0
  %1729 = vmatpush1.bf16.msra.mxu0 0
  %1730 = vmatprep.subr.bf16.mxu0 0
  %1731 = vmatpush1.bf16.msra.mxu0 0
  %1732 = vmatprep.subr.bf16.mxu0 0
  %1733 = vmatpush1.bf16.msra.mxu0 %v1720
  %1734 = vmatprep.subr.bf16.mxu0 0
  %1735 = vmatpush1.bf16.msra.mxu0 %v1692
  %1736 = vmatprep.subr.bf16.mxu0 0
  %1737 = vmatpush1.bf16.msra.mxu0 %v1689
  %1738 = vmatprep.subr.bf16.mxu0 0
  %1739 = vmatpush2.bf16.msra.mxu0 0
  %1740 = vmatprep.subr.bf16.mxu0 0
  %1741 = vmatpush2.bf16.msra.mxu0 0
  %1742 = vmatprep.subr.bf16.mxu0 0
  %1743 = vmatpush2.bf16.msra.mxu0 0
  %1744 = vmatprep.subr.bf16.mxu0 0
  %1745 = vmatpush2.bf16.msra.mxu0 0
  %1746 = vmatprep.subr.bf16.mxu0 0
  %1747 = vmatpush2.bf16.msra.mxu0 0
  %1748 = vmatprep.subr.bf16.mxu0 0
  %1749 = vmatpush2.bf16.msra.mxu0 0
  %1750 = vmatprep.subr.bf16.mxu0 0
  %1751 = vmatpush2.bf16.msra.mxu0 0
  %1752 = vmatprep.subr.bf16.mxu0 0
  %1753 = vmatpush2.bf16.msra.mxu0 0
  %1754 = vmatprep.mubr.bf16.mxu0 0
  %1755 = vmatmul.mubr.bf16.gmra.mxu0 %v1717
  %v1756 = vpop.f32.mrf.mxu0
  %v1757 = vadd.f32 %v1703, %v1756
  %v1758 = vpop.f32.mrf.mxu0
  %v1759 = vpop.f32.mrf.mxu0
  %v1760 = vadd.f32 %v1708, %v1759
  %v1761 = vpop.f32.mrf.mxu0
  %1762 = vdwg.mxu0
  %v1763 = vmin.f32 %v1757, 20.0
  %v1764 = vmin.f32 %v1760, 20.0
  %v1765 = vmul.f32 %v1763, 1.442695
  %v1766 = vpow.pop %v1765
  %v1767 = vmul.f32 %v1764, 1.442695
  %v1768 = vpow.pop %v1767
  %v1769 = vadd.f32 %v1766, 1.0
  %v1770 = vadd.f32 %v1768, 1.0
  %v1771 = vmul.f32 %v1769, %v1769
  %v1772 = vmul.f32 %v1770, %v1770
  %v1773 = vsub.f32 %v1771, 1.0
  %v1774 = vsub.f32 %v1772, 1.0
  %v1775 = vadd.f32 %v1771, 1.0
  %v1776 = vadd.f32 %v1772, 1.0
  %v1777 = vrcp.pop %v1775
  %v1778 = vrcp.pop %v1776
  %v1779 = vmul.f32 %v1773, %v1777
  %v1780 = vmul.f32 %v1774, %v1778
  %vm1781 = vcmp.gt.f32.partialorder %v1757, 20.0
  %vm1782 = vcmp.gt.f32.partialorder %v1760, 20.0
  %v1783 = vsel %vm1781, 1.0, %v1779
  %v1784 = vsel %vm1782, 1.0, %v1780
  %v1785 = vmul.f32 %v1757, %v1783
  %v1786 = vmul.f32 %v1760, %v1784
  %v1787 = vpack.c.bf16 %v1786, %v1785
  %v1789 = vunpack.c.l.b16 %v1787
  %v1790 = vunpack.c.h.b16 %v1787
  %v1791 = vpack.c.b16 %v1789, %v1789
  %v1792 = vpack.c.b16 %v1790, %v1790
  %1795 = vst [vmem:[%s3] sm:$0xf] %v1791
  %1796 = vst [vmem:[%s3 + $0x4] sm:$0xf] %v1792
  // Predicated region
  $region14: #{cspnet_forward.2} parent=0 // pred_check
    _
  $region15: #{cspnet_forward.2} parent=0 // pred_check_branch
    %1798 = sbr.rel (0) target = $region17
  $region16: #{cspnet_forward.2} parent=0 // pred_region
    _
  $region17: #{cspnet_forward.2} parent=0 // pred_fallthru
    _
  // Predicated region
  $region18: #{cspnet_forward.2} parent=0 // pred_check
    _
  $region19: #{cspnet_forward.2} parent=0 // pred_check_branch
    %1800 = sbr.rel (0) target = $region21
  $region20: #{cspnet_forward.2} parent=0 // pred_region
    _
  $region21: #{cspnet_forward.2} parent=0 // pred_fallthru
    _

</llo_original>
